<compile_context>
chip_gen: v7x
topology: tpu7x:2x2x1
jax: 0.10.0
libtpu: 0.0.40
codegen_flags: <defaults>
</compile_context>

<pallas_src>
import jax
import jax.numpy as jnp
import numpy as np
from jax import lax
from jax.experimental import pallas as pl
from jax.experimental.pallas import tpu as pltpu

BN_EPS = 1e-5
_LANE = 128


def _round_up(x, m):
    return (x + m - 1) // m * m


def _pick_row_block(H, W, target_m=256):
    """Smallest divisor TH of H with TH*W >= target_m (falls back to TH = H)."""
    for th in range(1, H + 1):
        if H % th == 0 and th * W >= target_m:
            return th
    return H


# ----------------------------------------------------------------------------------
# Shared conv body: one halo block -> one MXU matmul (im2col built in VMEM)
# ----------------------------------------------------------------------------------
def _conv_block(x_ref, w_ref):
    """x_ref: (TH+2, W+2, Cin) bf16 halo block; w_ref: (9*Cin, Cpad) bf16.

    Returns the pre-BN conv output for this block, shape (TH*W, Cpad), f32.
    """
    th2, w2, cin = x_ref.shape
    th, w_out = th2 - 2, w2 - 2
    xv = x_ref[...]                                           # (TH+2, W+2, Cin) bf16
    taps = []
    for kh in range(3):
        for kw in range(3):
            # static shifted window, flattened to (TH*W, Cin); row m = r*W + c
            taps.append(xv[kh:kh + th, kw:kw + w_out, :].reshape(th * w_out, cin))
    lhs = jnp.concatenate(taps, axis=-1)                      # (TH*W, 9*Cin) bf16
    return jnp.dot(lhs, w_ref[...], preferred_element_type=jnp.float32)


# ----------------------------------------------------------------------------------
# Pass 1: conv + per-batch-shard BatchNorm sum / sum-of-squares (no y materialized)
# ----------------------------------------------------------------------------------
def conv_stats_kernel(x_ref, w_ref, sum_ref, sq_ref):
    """Grid = (N, H//TH).  sum_ref / sq_ref: (1, Cpad) f32, resident per-n accumulators."""
    @pl.when(pl.program_id(1) == 0)
    def _init():
        sum_ref[...] = jnp.zeros_like(sum_ref)
        sq_ref[...] = jnp.zeros_like(sq_ref)

    acc = _conv_block(x_ref, w_ref)                           # (TH*W, Cpad) f32
    sum_ref[...] += jnp.sum(acc, axis=0, keepdims=True)
    sq_ref[...] += jnp.sum(acc * acc, axis=0, keepdims=True)


# ----------------------------------------------------------------------------------
# Pass 2: recompute conv, apply fused BN scale/shift, write final Cout-wide rows
# ----------------------------------------------------------------------------------
def conv_affine_kernel(x_ref, w_ref, scale_ref, shift_ref, o_ref):
    acc = _conv_block(x_ref, w_ref)                           # (TH*W, Cpad) f32
    y = acc * scale_ref[...] + shift_ref[...]                 # fused BN affine
    # TODO(synk): activation hook -- module default activation=None, so identity here.
    cout = o_ref.shape[-1]
    o_ref[...] = y[:, :cout].astype(o_ref.dtype)


def std_conv_act_bn(x_nchw, w_oihw, gamma, beta, eps=BN_EPS):
    """x_nchw: (N, Cin, H, W) f32; w_oihw: (Cout, Cin, 3, 3); gamma/beta: (Cout,)."""
    N, Cin, H, W = x_nchw.shape
    Cout = w_oihw.shape[0]
    assert w_oihw.shape == (Cout, Cin, 3, 3), "only k=3, s=1, p=1, groups=1 supported"

    Cpad = _round_up(Cout, _LANE)                 # lane-dense matmul output dim
    TH = _pick_row_block(H, W)                    # output rows per grid step
    HB = H // TH
    M = N * H * W

    # --- glue: NCHW -> NHWC, zero-pad (p=1), cut overlapping (TH+2)-row halo windows,
    #     and store the input in HBM as bf16 (the MXU operand dtype) ---
    x = jnp.transpose(x_nchw, (0, 2, 3, 1))                          # (N, H, W, Cin)
    xp = jnp.pad(x, ((0, 0), (1, 1), (1, 1), (0, 0)))                # (N, H+2, W+2, Cin)
    rows = (jnp.arange(HB) * TH)[:, None] + jnp.arange(TH + 2)[None, :]
    x_halo = jnp.take(xp, rows, axis=1).astype(jnp.bfloat16)         # (N, HB, TH+2, W+2, Cin)

    # weights: (Cout, Cin, 3, 3) -> im2col order (kh, kw, ci) x Cout, pad Cout -> Cpad
    w_k = jnp.transpose(w_oihw, (2, 3, 1, 0)).reshape(9 * Cin, Cout)
    w_k = jnp.pad(w_k, ((0, 0), (0, Cpad - Cout))).astype(jnp.bfloat16)

    x_spec = pl.BlockSpec((None, None, TH + 2, W + 2, Cin),
                          lambda n, h: (n, h, 0, 0, 0))
    w_spec = pl.BlockSpec((9 * Cin, Cpad), lambda n, h: (0, 0))

    # ---- Pass 1: conv + per-n BN statistics (exact f32 sums) ----
    sums, sqs = pl.pallas_call(
        conv_stats_kernel,
        grid=(N, HB),
        in_specs=[x_spec, w_spec],
        out_specs=(pl.BlockSpec((None, 1, Cpad), lambda n, h: (n, 0, 0)),
                   pl.BlockSpec((None, 1, Cpad), lambda n, h: (n, 0, 0))),
        out_shape=(jax.ShapeDtypeStruct((N, 1, Cpad), jnp.float32),
                   jax.ShapeDtypeStruct((N, 1, Cpad), jnp.float32)),
        compiler_params=pltpu.CompilerParams(
            dimension_semantics=("parallel", "arbitrary"),
            vmem_limit_bytes=32 * 1024 * 1024),
    )(x_halo, w_k)

    # --- tiny O(Cout) glue: combine shards, fold BN into a single scale/shift ---
    ssum = jnp.sum(sums[:, 0, :Cout], axis=0)
    ssq = jnp.sum(sqs[:, 0, :Cout], axis=0)
    mean = ssum / M
    var = jnp.maximum(ssq / M - mean * mean, 0.0)    # biased (training-mode) variance
    inv_std = lax.rsqrt(var + eps)
    scale = gamma.astype(jnp.float32) * inv_std
    shift = beta.astype(jnp.float32) - mean * scale
    scale_p = jnp.pad(scale, (0, Cpad - Cout)).reshape(1, Cpad)
    shift_p = jnp.pad(shift, (0, Cpad - Cout)).reshape(1, Cpad)

    # ---- Pass 2: recompute conv + fused affine; write final rows (no Cpad inflation) ----
    out4 = pl.pallas_call(
        conv_affine_kernel,
        grid=(N, HB),
        in_specs=[x_spec, w_spec,
                  pl.BlockSpec((1, Cpad), lambda n, h: (0, 0)),
                  pl.BlockSpec((1, Cpad), lambda n, h: (0, 0))],
        out_specs=pl.BlockSpec((None, None, TH * W, Cout), lambda n, h: (n, h, 0, 0)),
        out_shape=jax.ShapeDtypeStruct((N, HB, TH * W, Cout), jnp.float32),
        compiler_params=pltpu.CompilerParams(
            dimension_semantics=("parallel", "parallel"),
            vmem_limit_bytes=32 * 1024 * 1024),
    )(x_halo, w_k, scale_p, shift_p)

    # back to NCHW (PyTorch convention)
    out = out4.reshape(N, H, W, Cout)
    return jnp.transpose(out, (0, 3, 1, 2))


def reference(x_nchw, w_oihw, gamma, beta):
    """Pure-JAX f32 reference: lax conv + train-mode batch norm."""
    y = lax.conv_general_dilated(
        x_nchw, w_oihw, window_strides=(1, 1), padding=((1, 1), (1, 1)),
        dimension_numbers=("NCHW", "OIHW", "NCHW"))
    mean = jnp.mean(y, axis=(0, 2, 3), keepdims=True)
    var = jnp.mean((y - mean) ** 2, axis=(0, 2, 3), keepdims=True)
    return gamma.reshape(1, -1, 1, 1) * (y - mean) * lax.rsqrt(var + BN_EPS) \
        + beta.reshape(1, -1, 1, 1)


if __name__ == "__main__":
    N, Cin, Cout, H, W = 2, 4, 8, 16, 16
    key = jax.random.PRNGKey(0)
    kx, kw, kg, kb = jax.random.split(key, 4)

    x = jax.random.normal(kx, (N, Cin, H, W), dtype=jnp.float32)
    conv_w = jax.random.normal(kw, (Cout, Cin, 3, 3), dtype=jnp.float32) * 0.1
    gamma = 1.0 + 0.1 * jax.random.normal(kg, (Cout,), dtype=jnp.float32)
    beta = 0.1 * jax.random.normal(kb, (Cout,), dtype=jnp.float32)

    out = std_conv_act_bn(x, conv_w, gamma, beta)
    out = jax.block_until_ready(out)

    ref = jax.block_until_ready(reference(x, conv_w, gamma, beta))
    # bf16 MXU operands with f32 accumulation -> relaxed tolerance vs f32 reference
    np.testing.assert_allclose(np.asarray(out), np.asarray(ref), atol=2e-2, rtol=2e-2)
    print("KERNEL_OK")
</pallas_src>

<mosaic_0001>
module attributes {stable_mosaic.version = 11 : i64} {
  func.func @conv_stats_kernel(%arg0: i32, %arg1: i32, %arg2: memref<1x1x18x18x4xbf16, #tpu.memory_space<vmem>>, %arg3: memref<36x128xbf16, #tpu.memory_space<vmem>>, %arg4: memref<1x1x128xf32, #tpu.memory_space<vmem>>, %arg5: memref<1x1x128xf32, #tpu.memory_space<vmem>>) attributes {dimension_semantics = [#tpu.dimension_semantics<parallel>, #tpu.dimension_semantics<arbitrary>], iteration_bounds = array<i64: 2, 1>, scalar_prefetch = 0 : i64, scratch_operands = 0 : i64, tpu.core_type = #tpu.core_type<tc>, window_params = [{transform_indices = @transform_0, window_bounds = array<i64: 1, 1, 18, 18, 4>}, {pipeline_mode = #tpu.pipeline_mode<synchronous>, transform_indices = @transform_1, window_bounds = array<i64: 36, 128>}, {transform_indices = @transform_2, window_bounds = array<i64: 1, 1, 128>}, {transform_indices = @transform_3, window_bounds = array<i64: 1, 1, 128>}]} {
    %c0_i32 = arith.constant 0 : i32
    %0 = arith.cmpi eq, %arg1, %c0_i32 : i32
    %1 = arith.extui %0 : i1 to i32
    %c0_i32_0 = arith.constant 0 : i32
    %2 = arith.cmpi ne, %1, %c0_i32_0 : i32
    scf.if %2 {
      %cst_21 = arith.constant 0.000000e+00 : f32
      %43 = vector.broadcast %cst_21 : f32 to vector<1x128xf32>
      %c0_22 = arith.constant 0 : index
      %c0_23 = arith.constant 0 : index
      %c0_24 = arith.constant 0 : index
      %44 = vector.load %arg4[%c0_22, %c0_23, %c0_24] : memref<1x1x128xf32, #tpu.memory_space<vmem>>, vector<1x1x128xf32>
      %45 = vector.shape_cast %44 : vector<1x1x128xf32> to vector<1x128xf32>
      %46 = vector.shape_cast %43 : vector<1x128xf32> to vector<1x1x128xf32>
      tpu.vector_store %arg4[%c0_22, %c0_23, %c0_24], %46 {strides = array<i32>} : memref<1x1x128xf32, #tpu.memory_space<vmem>>, vector<1x1x128xf32>,
      %cst_25 = arith.constant 0.000000e+00 : f32
      %47 = vector.broadcast %cst_25 : f32 to vector<1x128xf32>
      %c0_26 = arith.constant 0 : index
      %c0_27 = arith.constant 0 : index
      %c0_28 = arith.constant 0 : index
      %48 = vector.load %arg5[%c0_26, %c0_27, %c0_28] : memref<1x1x128xf32, #tpu.memory_space<vmem>>, vector<1x1x128xf32>
      %49 = vector.shape_cast %48 : vector<1x1x128xf32> to vector<1x128xf32>
      %50 = vector.shape_cast %47 : vector<1x128xf32> to vector<1x1x128xf32>
      tpu.vector_store %arg5[%c0_26, %c0_27, %c0_28], %50 {strides = array<i32>} : memref<1x1x128xf32, #tpu.memory_space<vmem>>, vector<1x1x128xf32>,
    } else {
    }
    %c0 = arith.constant 0 : index
    %c0_1 = arith.constant 0 : index
    %c0_2 = arith.constant 0 : index
    %c0_3 = arith.constant 0 : index
    %c0_4 = arith.constant 0 : index
    %3 = vector.load %arg2[%c0, %c0_1, %c0_2, %c0_3, %c0_4] : memref<1x1x18x18x4xbf16, #tpu.memory_space<vmem>>, vector<1x1x18x18x4xbf16>
    %4 = vector.shape_cast %3 : vector<1x1x18x18x4xbf16> to vector<18x18x4xbf16>
    %5 = vector.extract_strided_slice %4 {offsets = [0, 0, 0], sizes = [16, 16, 4], strides = [1, 1, 1]} : vector<18x18x4xbf16> to vector<16x16x4xbf16>
    %6 = vector.shape_cast %5 : vector<16x16x4xbf16> to vector<256x4xbf16>
    %7 = vector.extract_strided_slice %4 {offsets = [0, 1, 0], sizes = [16, 16, 4], strides = [1, 1, 1]} : vector<18x18x4xbf16> to vector<16x16x4xbf16>
    %8 = vector.shape_cast %7 : vector<16x16x4xbf16> to vector<256x4xbf16>
    %9 = vector.extract_strided_slice %4 {offsets = [0, 2, 0], sizes = [16, 16, 4], strides = [1, 1, 1]} : vector<18x18x4xbf16> to vector<16x16x4xbf16>
    %10 = vector.shape_cast %9 : vector<16x16x4xbf16> to vector<256x4xbf16>
    %11 = vector.extract_strided_slice %4 {offsets = [1, 0, 0], sizes = [16, 16, 4], strides = [1, 1, 1]} : vector<18x18x4xbf16> to vector<16x16x4xbf16>
    %12 = vector.shape_cast %11 : vector<16x16x4xbf16> to vector<256x4xbf16>
    %13 = vector.extract_strided_slice %4 {offsets = [1, 1, 0], sizes = [16, 16, 4], strides = [1, 1, 1]} : vector<18x18x4xbf16> to vector<16x16x4xbf16>
    %14 = vector.shape_cast %13 : vector<16x16x4xbf16> to vector<256x4xbf16>
    %15 = vector.extract_strided_slice %4 {offsets = [1, 2, 0], sizes = [16, 16, 4], strides = [1, 1, 1]} : vector<18x18x4xbf16> to vector<16x16x4xbf16>
    %16 = vector.shape_cast %15 : vector<16x16x4xbf16> to vector<256x4xbf16>
    %17 = vector.extract_strided_slice %4 {offsets = [2, 0, 0], sizes = [16, 16, 4], strides = [1, 1, 1]} : vector<18x18x4xbf16> to vector<16x16x4xbf16>
    %18 = vector.shape_cast %17 : vector<16x16x4xbf16> to vector<256x4xbf16>
    %19 = vector.extract_strided_slice %4 {offsets = [2, 1, 0], sizes = [16, 16, 4], strides = [1, 1, 1]} : vector<18x18x4xbf16> to vector<16x16x4xbf16>
    %20 = vector.shape_cast %19 : vector<16x16x4xbf16> to vector<256x4xbf16>
    %21 = vector.extract_strided_slice %4 {offsets = [2, 2, 0], sizes = [16, 16, 4], strides = [1, 1, 1]} : vector<18x18x4xbf16> to vector<16x16x4xbf16>
    %22 = vector.shape_cast %21 : vector<16x16x4xbf16> to vector<256x4xbf16>
    %23 = tpu.concatenate %6, %8, %10, %12, %14, %16, %18, %20, %22 in 1 : vector<256x4xbf16>, vector<256x4xbf16>, vector<256x4xbf16>, vector<256x4xbf16>, vector<256x4xbf16>, vector<256x4xbf16>, vector<256x4xbf16>, vector<256x4xbf16>, vector<256x4xbf16> -> vector<256x36xbf16>
    %c0_5 = arith.constant 0 : index
    %c0_6 = arith.constant 0 : index
    %24 = vector.load %arg3[%c0_5, %c0_6] : memref<36x128xbf16, #tpu.memory_space<vmem>>, vector<36x128xbf16>
    %cst = arith.constant dense<0.000000e+00> : vector<256x128xf32>
    %25 = tpu.matmul %23, %24, %cst {dimension_numbers = #tpu.dot_dimension_numbers<[1], [0], [0], [1], [0, 0, 1, 1], [], []>} : vector<256x36xbf16>, vector<36x128xbf16>, vector<256x128xf32> -> vector<256x128xf32>
    %c0_7 = arith.constant 0 : index
    %c0_8 = arith.constant 0 : index
    %c0_9 = arith.constant 0 : index
    %26 = vector.load %arg4[%c0_7, %c0_8, %c0_9] : memref<1x1x128xf32, #tpu.memory_space<vmem>>, vector<1x1x128xf32>
    %27 = vector.shape_cast %26 : vector<1x1x128xf32> to vector<1x128xf32>
    %cst_10 = arith.constant dense<0.000000e+00> : vector<128xf32>
    %28 = vector.multi_reduction <add>, %25, %cst_10 [0] : vector<256x128xf32> to vector<128xf32>
    %29 = vector.shape_cast %28 : vector<128xf32> to vector<1x128xf32>
    %30 = arith.addf %27, %29 : vector<1x128xf32>
    %c0_11 = arith.constant 0 : index
    %c0_12 = arith.constant 0 : index
    %c0_13 = arith.constant 0 : index
    %31 = vector.load %arg4[%c0_11, %c0_12, %c0_13] : memref<1x1x128xf32, #tpu.memory_space<vmem>>, vector<1x1x128xf32>
    %32 = vector.shape_cast %31 : vector<1x1x128xf32> to vector<1x128xf32>
    %33 = vector.shape_cast %30 : vector<1x128xf32> to vector<1x1x128xf32>
    tpu.vector_store %arg4[%c0_11, %c0_12, %c0_13], %33 {strides = array<i32>} : memref<1x1x128xf32, #tpu.memory_space<vmem>>, vector<1x1x128xf32>,
    %c0_14 = arith.constant 0 : index
    %c0_15 = arith.constant 0 : index
    %c0_16 = arith.constant 0 : index
    %34 = vector.load %arg5[%c0_14, %c0_15, %c0_16] : memref<1x1x128xf32, #tpu.memory_space<vmem>>, vector<1x1x128xf32>
    %35 = vector.shape_cast %34 : vector<1x1x128xf32> to vector<1x128xf32>
    %36 = arith.mulf %25, %25 : vector<256x128xf32>
    %cst_17 = arith.constant dense<0.000000e+00> : vector<128xf32>
    %37 = vector.multi_reduction <add>, %36, %cst_17 [0] : vector<256x128xf32> to vector<128xf32>
    %38 = vector.shape_cast %37 : vector<128xf32> to vector<1x128xf32>
    %39 = arith.addf %35, %38 : vector<1x128xf32>
    %c0_18 = arith.constant 0 : index
    %c0_19 = arith.constant 0 : index
    %c0_20 = arith.constant 0 : index
    %40 = vector.load %arg5[%c0_18, %c0_19, %c0_20] : memref<1x1x128xf32, #tpu.memory_space<vmem>>, vector<1x1x128xf32>
    %41 = vector.shape_cast %40 : vector<1x1x128xf32> to vector<1x128xf32>
    %42 = vector.shape_cast %39 : vector<1x128xf32> to vector<1x1x128xf32>
    tpu.vector_store %arg5[%c0_18, %c0_19, %c0_20], %42 {strides = array<i32>} : memref<1x1x128xf32, #tpu.memory_space<vmem>>, vector<1x1x128xf32>,
    return
  }
  func.func @transform_0(%arg0: i32, %arg1: i32) -> (i32, i32, i32, i32, i32) {
    %c0_i32 = arith.constant 0 : i32
    %c0_i32_0 = arith.constant 0 : i32
    %c0_i32_1 = arith.constant 0 : i32
    %c0_i32_2 = arith.constant 0 : i32
    return %arg0, %arg1, %c0_i32, %c0_i32_0, %c0_i32_1 : i32, i32, i32, i32, i32
  }
  func.func @transform_1(%arg0: i32, %arg1: i32) -> (i32, i32) {
    %c0_i32 = arith.constant 0 : i32
    %c0_i32_0 = arith.constant 0 : i32
    %c0_i32_1 = arith.constant 0 : i32
    return %c0_i32, %c0_i32_0 : i32, i32
  }
  func.func @transform_2(%arg0: i32, %arg1: i32) -> (i32, i32, i32) {
    %c0_i32 = arith.constant 0 : i32
    %c0_i32_0 = arith.constant 0 : i32
    %c0_i32_1 = arith.constant 0 : i32
    return %arg0, %c0_i32, %c0_i32_0 : i32, i32, i32
  }
  func.func @transform_3(%arg0: i32, %arg1: i32) -> (i32, i32, i32) {
    %c0_i32 = arith.constant 0 : i32
    %c0_i32_0 = arith.constant 0 : i32
    %c0_i32_1 = arith.constant 0 : i32
    return %arg0, %c0_i32, %c0_i32_0 : i32, i32, i32
  }
}

</mosaic_0001>

<llo_original>
// kernel: tpu_custom_call.1
$region0: #{tpu_custom_call.1}
  #allocation0 [shape = 'u32[]', space=smem, size = 0x4, offset = 0x4, fixed_abs, tag = 'smem constant byte address 0x4 - core index']
  #allocation1 [shape = 'u32[144,128]{1,0:T(1,128)}', space=vmem, size = 0x12000, scoped, tag = 'internal scratch']
  %s0 = inlined_call_operand.vmem [shape: bf16[2,1,18,18,4], index: 0, kind: input, shape index: {}]
  %s1 = inlined_call_operand.vmem [shape: bf16[36,128], index: 1, kind: input, shape index: {}]
  %s2 = inlined_call_operand.hbm [shape: f32[2,1,128], index: 2, kind: output, shape index: {0}]
  %s3 = inlined_call_operand.hbm [shape: f32[2,1,128], index: 3, kind: output, shape index: {1}]
  %4 = xla_tuple %s2, %s3
  %s5 = sld [smem:[#allocation0]]
  $region53: #{tpu_custom_call.1} parent=0
    _
  %s7 = ssub.s32 1, %s5
  %s8 = scalar_select 0, %s7, %s5
  $region1: #{tpu_custom_call.1} parent=0
    #allocation2 [shape = 'u8[1024]{0}', space=vmem, size = 0x400, scoped, tag = 'output window, operand 0']
    #allocation3 [shape = 's32[2]{0}', space=sflag, size = 0x8, scoped, tag = 'scoped memory for tpu_custom_call.1']
    #allocation4 [shape = 'u8[1024]{0}', space=vmem, size = 0x400, scoped, tag = 'output window, operand 1']
    #allocation5 [shape = 's32[2]{0}', space=sflag, size = 0x8, scoped, tag = 'scoped memory for tpu_custom_call.1']
    %9 = vsyncpa [#allocation3], 0
    %s10 = scalar_lea.sflag [#allocation3], 1
    %11 = vsyncpa %s10, 0
    %12 = vsyncpa [#allocation5], 0
    %s13 = scalar_lea.sflag [#allocation5], 1
    %14 = vsyncpa %s13, 0
    loop: start=0, step=1, limit=4
    $region2: #{tpu_custom_call.1} parent=1 // loop_pre_header
      _
    $region3: #{tpu_custom_call.1} parent=1 // loop_header
      %s16 = sphi 0, %s20
      %p17 = scmp.ge.s32.totalorder %s16, 4
      %s23 = sphi 0, %s35
      %s24 = sphi 0, %s31
      %s25 = sphi 0, %s23
      %s26 = sphi 0, %s24
      %s27 = sphi 0, %s25
      %s28 = sphi 0, %s26
      %s40 = sphi 0, %s42
      %s43 = sphi 0, %s40
      %s44 = sphi 0, %s43
      %s60 = sphi 0, %s44
      %s64 = sphi 0, %s64
      %s66 = sphi 0, %s64
      %s67 = sphi 0, %s66
      %s81 = sphi 0, %s67
      %s87 = sphi 0, %s89
      %s90 = sphi 0, %s87
      %s91 = sphi 0, %s90
      %s107 = sphi 0, %s91
      %s113 = sphi 0, %s115
      %s116 = sphi 0, %s113
      %s117 = sphi 0, %s116
      %s133 = sphi 0, %s117
    $region4: #{tpu_custom_call.1} parent=1 // loop_header_branch
      %19 = sbr.rel (%p17) target = $region8
    $region5: #{tpu_custom_call.1} parent=1 // loop_body
      %s21 = ssub.s32 %s16, 1
      %s22 = ssub.s32 %s16, 2
      %s29 = sadd.s32 1, %s24
      %p30 = scmp.ge.s32.totalorder %s29, 1
      %s31 = scalar_select %p30, 0, %s29
      %s32 = sadd.s32 1, %s23
      %s33 = scalar_select %p30, %s32, %s23
      %p34 = scmp.ge.s32.totalorder %s33, 2
      %s35 = scalar_select %p34, 0, %s33
      %s36 = ssub.s32 %s23, %s35
      %s37 = ssub.s32 %s24, %s31
      %s38 = sor.u32 %s36, %s37
      %p39 = scmp.eq.s32.totalorder %s38, 0
      %s41 = sadd.s32 %s40, 1
      %s42 = scalar_select %p39, %s40, %s41
      %p45 = pneg %p39
      %p46 = scmp.eq.s32.totalorder %s16, 1
      %p47 = por %p45, %p46
      %p48 = scmp.ne.s32.totalorder %s40, %s43
      %p49 = scmp.eq.s32.totalorder %s16, 0
      %p50 = por %p48, %p49
      %p51 = scmp.ne.s32.totalorder %s40, %s43
      %p52 = scmp.eq.s32.totalorder %s21, 1
      %p53 = por %p51, %p52
      %p54 = scmp.ne.s32.totalorder %s43, %s44
      %p55 = scmp.eq.s32.totalorder %s21, 0
      %p56 = por %p54, %p55
      %p57 = scmp.ne.s32.totalorder %s43, %s44
      %p58 = scmp.eq.s32.totalorder %s22, 1
      %p59 = por %p57, %p58
      %p61 = scmp.ne.s32.totalorder %s44, %s60
      %p62 = scmp.eq.s32.totalorder %s22, 0
      %p63 = por %p61, %p62
      %s65 = sadd.s32 %s64, 1
      %p68 = scmp.eq.s32.totalorder %s16, 1
      %p69 = scmp.ne.s32.totalorder %s64, %s66
      %p70 = scmp.eq.s32.totalorder %s16, 0
      %p71 = por %p69, %p70
      %p72 = scmp.ne.s32.totalorder %s64, %s66
      %p73 = scmp.eq.s32.totalorder %s21, 1
      %p74 = por %p72, %p73
      %p75 = scmp.ne.s32.totalorder %s66, %s67
      %p76 = scmp.eq.s32.totalorder %s21, 0
      %p77 = por %p75, %p76
      %p78 = scmp.ne.s32.totalorder %s66, %s67
      %p79 = scmp.eq.s32.totalorder %s22, 1
      %p80 = por %p78, %p79
      %p82 = scmp.ne.s32.totalorder %s67, %s81
      %p83 = scmp.eq.s32.totalorder %s22, 0
      %p84 = por %p82, %p83
      %s85 = ssub.s32 %s23, %s35
      %p86 = scmp.eq.s32.totalorder %s85, 0
      %s88 = sadd.s32 %s87, 1
      %s89 = scalar_select %p86, %s87, %s88
      %p92 = pneg %p86
      %p93 = scmp.eq.s32.totalorder %s16, 1
      %p94 = por %p92, %p93
      %p95 = scmp.ne.s32.totalorder %s87, %s90
      %p96 = scmp.eq.s32.totalorder %s16, 0
      %p97 = por %p95, %p96
      %p98 = scmp.ne.s32.totalorder %s87, %s90
      %p99 = scmp.eq.s32.totalorder %s21, 1
      %p100 = por %p98, %p99
      %p101 = scmp.ne.s32.totalorder %s90, %s91
      %p102 = scmp.eq.s32.totalorder %s21, 0
      %p103 = por %p101, %p102
      %p104 = scmp.ne.s32.totalorder %s90, %s91
      %p105 = scmp.eq.s32.totalorder %s22, 1
      %p106 = por %p104, %p105
      %p108 = scmp.ne.s32.totalorder %s91, %s107
      %p109 = scmp.eq.s32.totalorder %s22, 0
      %p110 = por %p108, %p109
      %s111 = ssub.s32 %s23, %s35
      %p112 = scmp.eq.s32.totalorder %s111, 0
      %s114 = sadd.s32 %s113, 1
      %s115 = scalar_select %p112, %s113, %s114
      %p118 = pneg %p112
      %p119 = scmp.eq.s32.totalorder %s16, 1
      %p120 = por %p118, %p119
      %p121 = scmp.ne.s32.totalorder %s113, %s116
      %p122 = scmp.eq.s32.totalorder %s16, 0
      %p123 = por %p121, %p122
      %p124 = scmp.ne.s32.totalorder %s113, %s116
      %p125 = scmp.eq.s32.totalorder %s21, 1
      %p126 = por %p124, %p125
      %p127 = scmp.ne.s32.totalorder %s116, %s117
      %p128 = scmp.eq.s32.totalorder %s21, 0
      %p129 = por %p127, %p128
      %p130 = scmp.ne.s32.totalorder %s116, %s117
      %p131 = scmp.eq.s32.totalorder %s22, 1
      %p132 = por %p130, %p131
      %p134 = scmp.ne.s32.totalorder %s117, %s133
      %p135 = scmp.eq.s32.totalorder %s22, 0
      %p136 = por %p134, %p135
      %p137 = scmp.le.s32.totalorder 1, %s16
      %p138 = scmp.lt.s32.totalorder %s16, 3
      %p139 = pnand %p137, %p138
      %p140 = pneg %p139
      // Predicated region
      $region9: #{tpu_custom_call.1} parent=5 // pred_check
        _
      $region10: #{tpu_custom_call.1} parent=5 // pred_check_branch
        %142 = sbr.rel (%p139) target = $region12
      $region11: #{tpu_custom_call.1} parent=5 // pred_region
        %s143 = ssub.s32 %s16, 1
        // Predicated region
        $region13: #{tpu_custom_call.1} parent=11 // pred_check
          %p144 = pneg %p77
        $region14: #{tpu_custom_call.1} parent=11 // pred_check_branch
          %146 = sbr.rel (%p144) target = $region16
        $region15: #{tpu_custom_call.1} parent=11 // pred_region
          _
        $region16: #{tpu_custom_call.1} parent=11 // pred_fallthru
          _
      $region12: #{tpu_custom_call.1} parent=5 // pred_fallthru
        _
      %p147 = scmp.lt.s32.totalorder %s16, 2
      // Predicated region
      $region17: #{tpu_custom_call.1} parent=5 // pred_check
        %p148 = pneg %p147
      $region18: #{tpu_custom_call.1} parent=5 // pred_check_branch
        %150 = sbr.rel (%p148) target = $region20
      $region19: #{tpu_custom_call.1} parent=5 // pred_region
        // Predicated region
        $region21: #{tpu_custom_call.1} parent=19 // pred_check
          %p151 = pneg %p50
        $region22: #{tpu_custom_call.1} parent=19 // pred_check_branch
          %153 = sbr.rel (%p151) target = $region24
        $region23: #{tpu_custom_call.1} parent=19 // pred_region
          %p154 = scmp.lt.s32.totalorder %s23, 1
          %s155 = scalar_select %p154, %s23, 1
          %p156 = scmp.lt.s32.totalorder %s24, 0
          %s157 = scalar_select %p156, %s24, 0
          %s158 = smul.addr %s157, 54
          %s159 = smul.addr %s155, 54
          %s160 = sadd.s32 %s158, %s159
          %s161 = smul.addr %s160, 4
          %s162 = scalar_lea.vmem %s0, %s161
        $region24: #{tpu_custom_call.1} parent=19 // pred_fallthru
          _
      $region20: #{tpu_custom_call.1} parent=5 // pred_fallthru
        _
      %p163 = scmp.le.s32.totalorder 1, %s16
      %p164 = scmp.lt.s32.totalorder %s16, 3
      %p165 = pnand %p163, %p164
      %p166 = pneg %p165
      // Predicated region
      $region25: #{tpu_custom_call.1} parent=5 // pred_check
        _
      $region26: #{tpu_custom_call.1} parent=5 // pred_check_branch
        %168 = sbr.rel (%p165) target = $region28
      $region27: #{tpu_custom_call.1} parent=5 // pred_region
        %s169 = ssub.s32 %s16, 1
        %p170 = scmp.lt.s32.totalorder %s25, 1
        %s171 = scalar_select %p170, %s25, 1
        %p172 = scmp.lt.s32.totalorder %s26, 0
        %s173 = scalar_select %p172, %s26, 0
        %s174 = smul.addr %s173, 54
        %s175 = smul.addr %s171, 54
        %s176 = sadd.s32 %s174, %s175
        %s177 = smul.addr %s176, 4
        %s178 = scalar_lea.vmem %s0, %s177
        %p179 = pneg %p56
        %p180 = pneg %p53
        %p181 = pneg %p77
        %p182 = pneg %p74
        %p183 = pneg %p103
        %p184 = pneg %p100
        %s185 = sand.u32 %s90, 1
        %s186 = scalar_lea.sflag [#allocation3], %s185
        %s187 = sand.u32 %s90, 1
        %s188 = scalar_lea.vmem [#allocation2], %s187
        %p189 = pneg %p129
        %p190 = pneg %p126
        %s191 = sand.u32 %s116, 1
        %s192 = scalar_lea.sflag [#allocation5], %s191
        %s193 = sand.u32 %s116, 1
        %s194 = scalar_lea.vmem [#allocation4], %s193
        %p195 = scmp.lt.s32.totalorder %s25, 1
        %s196 = scalar_select %p195, %s25, 1
        %p197 = scmp.lt.s32.totalorder %s26, 0
        %s198 = scalar_select %p197, %s26, 0
        %s199 = smul.addr %s198, 54
        %s200 = smul.addr %s196, 54
        %s201 = sadd.s32 %s199, %s200
        %s202 = smul.addr %s201, 4
        %s203 = scalar_lea.vmem %s0, %s202
        %p205 = scmp.eq.s32.totalorder %s26, 0
        // Predicated region
        $region29: #{tpu_custom_call.1} parent=27 // pred_check
          %p206 = pneg %p205
        $region30: #{tpu_custom_call.1} parent=27 // pred_check_branch
          %208 = sbr.rel (%p206) target = $region32
        $region31: #{tpu_custom_call.1} parent=27 // pred_region
          %209 = vst [vmem:[%s188] sm:$0x1] 0.0
          %210 = vst [vmem:[%s194] sm:$0x1] 0.0
        $region32: #{tpu_custom_call.1} parent=27 // pred_fallthru
          _
        %v211 = vld [vmem:[%s203] sm:$0xf]
        %v212 = vld [vmem:[%s203 + $0x4] sm:$0xf]
        %v213 = vld [vmem:[%s203 + $0x8] sm:$0x1]
        %v214 = vld [vmem:[%s203 + $0xc] sm:$0xf]
        %v215 = vld [vmem:[%s203 + $0x10] sm:$0xf]
        %v216 = vld [vmem:[%s203 + $0x14] sm:$0x1]
        %v217 = vld [vmem:[%s203 + $0x18] sm:$0xf]
        %v218 = vld [vmem:[%s203 + $0x1c] sm:$0xf]
        %v219 = vld [vmem:[%s203 + $0x20] sm:$0x1]
        %v220 = vld [vmem:[%s203 + $0x24] sm:$0xf]
        %v221 = vld [vmem:[%s203 + $0x28] sm:$0xf]
        %v222 = vld [vmem:[%s203 + $0x2c] sm:$0x1]
        %v223 = vld [vmem:[%s203 + $0x30] sm:$0xf]
        %v224 = vld [vmem:[%s203 + $0x34] sm:$0xf]
        %v225 = vld [vmem:[%s203 + $0x38] sm:$0x1]
        %v226 = vld [vmem:[%s203 + $0x3c] sm:$0xf]
        %v227 = vld [vmem:[%s203 + $0x40] sm:$0xf]
        %v228 = vld [vmem:[%s203 + $0x44] sm:$0x1]
        %v229 = vld [vmem:[%s203 + $0x48] sm:$0xf]
        %v230 = vld [vmem:[%s203 + $0x4c] sm:$0xf]
        %v231 = vld [vmem:[%s203 + $0x50] sm:$0x1]
        %v232 = vld [vmem:[%s203 + $0x54] sm:$0xf]
        %v233 = vld [vmem:[%s203 + $0x58] sm:$0xf]
        %v234 = vld [vmem:[%s203 + $0x5c] sm:$0x1]
        %v235 = vld [vmem:[%s203 + $0x60] sm:$0xf]
        %v236 = vld [vmem:[%s203 + $0x64] sm:$0xf]
        %v237 = vld [vmem:[%s203 + $0x68] sm:$0x1]
        %v238 = vld [vmem:[%s203 + $0x6c] sm:$0xf]
        %v239 = vld [vmem:[%s203 + $0x70] sm:$0xf]
        %v240 = vld [vmem:[%s203 + $0x74] sm:$0x1]
        %v241 = vld [vmem:[%s203 + $0x78] sm:$0xf]
        %v242 = vld [vmem:[%s203 + $0x7c] sm:$0xf]
        %v243 = vld [vmem:[%s203 + $0x80] sm:$0x1]
        %v244 = vld [vmem:[%s203 + $0x84] sm:$0xf]
        %v245 = vld [vmem:[%s203 + $0x88] sm:$0xf]
        %v246 = vld [vmem:[%s203 + $0x8c] sm:$0x1]
        %v247 = vld [vmem:[%s203 + $0x90] sm:$0xf]
        %v248 = vld [vmem:[%s203 + $0x94] sm:$0xf]
        %v249 = vld [vmem:[%s203 + $0x98] sm:$0x1]
        %v250 = vld [vmem:[%s203 + $0x9c] sm:$0xf]
        %v251 = vld [vmem:[%s203 + $0xa0] sm:$0xf]
        %v252 = vld [vmem:[%s203 + $0xa4] sm:$0x1]
        %v253 = vld [vmem:[%s203 + $0xa8] sm:$0xf]
        %v254 = vld [vmem:[%s203 + $0xac] sm:$0xf]
        %v255 = vld [vmem:[%s203 + $0xb0] sm:$0x1]
        %v256 = vld [vmem:[%s203 + $0xb4] sm:$0xf]
        %v257 = vld [vmem:[%s203 + $0xb8] sm:$0xf]
        %v258 = vld [vmem:[%s203 + $0xbc] sm:$0x1]
        %v259 = vld [vmem:[%s203 + $0xc0] sm:$0xf]
        %v260 = vld [vmem:[%s203 + $0xc4] sm:$0xf]
        %v261 = vld [vmem:[%s203 + $0xc8] sm:$0x1]
        %v262 = vld [vmem:[%s203 + $0xcc] sm:$0xf]
        %v263 = vld [vmem:[%s203 + $0xd0] sm:$0xf]
        %v264 = vld [vmem:[%s203 + $0xd4] sm:$0x1]
        %vm265 = vsmask.f32 3328
        %vm266 = vsmask.f32 7440
        %vm267 = vmor %vm265, %vm266
        %v269 = vshrl.u32 %v211, 16
        %v271 = vrot.slane %v269, 4
        %v272 = vshll.u32 %v211, 16
        %v274 = vrot.slane %v272, 5
        %v275 = vor.u32 %v271, %v274
        %v276 = vrot.slane %v275, 4
        %v278 = vshll.u32 %v212, 16
        %v280 = vrot.slane %v278, 5
        %v281 = vsel %vm267, %v276, %v280
        %v282 = vshrl.u32 %v212, 16
        %v284 = vrot.slane %v282, 4
        %v285 = vor.u32 %v284, %v280
        %v286 = vrot.slane %v285, 4
        %v288 = vshll.u32 %v213, 16
        %v290 = vrot.slane %v288, 5
        %v291 = vsel %vm267, %v286, %v290
        %v293 = vshrl.u32 %v214, 16
        %v295 = vrot.slane %v293, 4
        %v296 = vshll.u32 %v214, 16
        %v298 = vrot.slane %v296, 5
        %v299 = vor.u32 %v295, %v298
        %v300 = vrot.slane %v299, 4
        %v302 = vshll.u32 %v215, 16
        %v304 = vrot.slane %v302, 5
        %v305 = vsel %vm267, %v300, %v304
        %v306 = vshrl.u32 %v215, 16
        %v308 = vrot.slane %v306, 4
        %v309 = vor.u32 %v308, %v304
        %v310 = vrot.slane %v309, 4
        %v312 = vshll.u32 %v216, 16
        %v314 = vrot.slane %v312, 5
        %v315 = vsel %vm267, %v310, %v314
        %v317 = vshrl.u32 %v217, 16
        %v319 = vrot.slane %v317, 4
        %v320 = vshll.u32 %v217, 16
        %v322 = vrot.slane %v320, 5
        %v323 = vor.u32 %v319, %v322
        %v324 = vrot.slane %v323, 4
        %v326 = vshll.u32 %v218, 16
        %v328 = vrot.slane %v326, 5
        %v329 = vsel %vm267, %v324, %v328
        %v330 = vshrl.u32 %v218, 16
        %v332 = vrot.slane %v330, 4
        %v333 = vor.u32 %v332, %v328
        %v334 = vrot.slane %v333, 4
        %v336 = vshll.u32 %v219, 16
        %v338 = vrot.slane %v336, 5
        %v339 = vsel %vm267, %v334, %v338
        %v341 = vshrl.u32 %v220, 16
        %v343 = vrot.slane %v341, 4
        %v344 = vshll.u32 %v220, 16
        %v346 = vrot.slane %v344, 5
        %v347 = vor.u32 %v343, %v346
        %v348 = vrot.slane %v347, 4
        %v350 = vshll.u32 %v221, 16
        %v352 = vrot.slane %v350, 5
        %v353 = vsel %vm267, %v348, %v352
        %v354 = vshrl.u32 %v221, 16
        %v356 = vrot.slane %v354, 4
        %v357 = vor.u32 %v356, %v352
        %v358 = vrot.slane %v357, 4
        %v360 = vshll.u32 %v222, 16
        %v362 = vrot.slane %v360, 5
        %v363 = vsel %vm267, %v358, %v362
        %v365 = vshrl.u32 %v223, 16
        %v367 = vrot.slane %v365, 4
        %v368 = vshll.u32 %v223, 16
        %v370 = vrot.slane %v368, 5
        %v371 = vor.u32 %v367, %v370
        %v372 = vrot.slane %v371, 4
        %v374 = vshll.u32 %v224, 16
        %v376 = vrot.slane %v374, 5
        %v377 = vsel %vm267, %v372, %v376
        %v378 = vshrl.u32 %v224, 16
        %v380 = vrot.slane %v378, 4
        %v381 = vor.u32 %v380, %v376
        %v382 = vrot.slane %v381, 4
        %v384 = vshll.u32 %v225, 16
        %v386 = vrot.slane %v384, 5
        %v387 = vsel %vm267, %v382, %v386
        %v389 = vshrl.u32 %v226, 16
        %v391 = vrot.slane %v389, 4
        %v392 = vshll.u32 %v226, 16
        %v394 = vrot.slane %v392, 5
        %v395 = vor.u32 %v391, %v394
        %v396 = vrot.slane %v395, 4
        %v398 = vshll.u32 %v227, 16
        %v400 = vrot.slane %v398, 5
        %v401 = vsel %vm267, %v396, %v400
        %v402 = vshrl.u32 %v227, 16
        %v404 = vrot.slane %v402, 4
        %v405 = vor.u32 %v404, %v400
        %v406 = vrot.slane %v405, 4
        %v408 = vshll.u32 %v228, 16
        %v410 = vrot.slane %v408, 5
        %v411 = vsel %vm267, %v406, %v410
        %v413 = vshrl.u32 %v229, 16
        %v415 = vrot.slane %v413, 4
        %v416 = vshll.u32 %v229, 16
        %v418 = vrot.slane %v416, 5
        %v419 = vor.u32 %v415, %v418
        %v420 = vrot.slane %v419, 4
        %v422 = vshll.u32 %v230, 16
        %v424 = vrot.slane %v422, 5
        %v425 = vsel %vm267, %v420, %v424
        %v426 = vshrl.u32 %v230, 16
        %v428 = vrot.slane %v426, 4
        %v429 = vor.u32 %v428, %v424
        %v430 = vrot.slane %v429, 4
        %v432 = vshll.u32 %v231, 16
        %v434 = vrot.slane %v432, 5
        %v435 = vsel %vm267, %v430, %v434
        %v437 = vshrl.u32 %v232, 16
        %v439 = vrot.slane %v437, 4
        %v440 = vshll.u32 %v232, 16
        %v442 = vrot.slane %v440, 5
        %v443 = vor.u32 %v439, %v442
        %v444 = vrot.slane %v443, 4
        %v446 = vshll.u32 %v233, 16
        %v448 = vrot.slane %v446, 5
        %v449 = vsel %vm267, %v444, %v448
        %v450 = vshrl.u32 %v233, 16
        %v452 = vrot.slane %v450, 4
        %v453 = vor.u32 %v452, %v448
        %v454 = vrot.slane %v453, 4
        %v456 = vshll.u32 %v234, 16
        %v458 = vrot.slane %v456, 5
        %v459 = vsel %vm267, %v454, %v458
        %v461 = vshrl.u32 %v235, 16
        %v463 = vrot.slane %v461, 4
        %v464 = vshll.u32 %v235, 16
        %v466 = vrot.slane %v464, 5
        %v467 = vor.u32 %v463, %v466
        %v468 = vrot.slane %v467, 4
        %v470 = vshll.u32 %v236, 16
        %v472 = vrot.slane %v470, 5
        %v473 = vsel %vm267, %v468, %v472
        %v474 = vshrl.u32 %v236, 16
        %v476 = vrot.slane %v474, 4
        %v477 = vor.u32 %v476, %v472
        %v478 = vrot.slane %v477, 4
        %v480 = vshll.u32 %v237, 16
        %v482 = vrot.slane %v480, 5
        %v483 = vsel %vm267, %v478, %v482
        %v485 = vshrl.u32 %v238, 16
        %v487 = vrot.slane %v485, 4
        %v488 = vshll.u32 %v238, 16
        %v490 = vrot.slane %v488, 5
        %v491 = vor.u32 %v487, %v490
        %v492 = vrot.slane %v491, 4
        %v494 = vshll.u32 %v239, 16
        %v496 = vrot.slane %v494, 5
        %v497 = vsel %vm267, %v492, %v496
        %v498 = vshrl.u32 %v239, 16
        %v500 = vrot.slane %v498, 4
        %v501 = vor.u32 %v500, %v496
        %v502 = vrot.slane %v501, 4
        %v504 = vshll.u32 %v240, 16
        %v506 = vrot.slane %v504, 5
        %v507 = vsel %vm267, %v502, %v506
        %v509 = vshrl.u32 %v241, 16
        %v511 = vrot.slane %v509, 4
        %v512 = vshll.u32 %v241, 16
        %v514 = vrot.slane %v512, 5
        %v515 = vor.u32 %v511, %v514
        %v516 = vrot.slane %v515, 4
        %v518 = vshll.u32 %v242, 16
        %v520 = vrot.slane %v518, 5
        %v521 = vsel %vm267, %v516, %v520
        %v522 = vshrl.u32 %v242, 16
        %v524 = vrot.slane %v522, 4
        %v525 = vor.u32 %v524, %v520
        %v526 = vrot.slane %v525, 4
        %v528 = vshll.u32 %v243, 16
        %v530 = vrot.slane %v528, 5
        %v531 = vsel %vm267, %v526, %v530
        %v533 = vshrl.u32 %v244, 16
        %v535 = vrot.slane %v533, 4
        %v536 = vshll.u32 %v244, 16
        %v538 = vrot.slane %v536, 5
        %v539 = vor.u32 %v535, %v538
        %v540 = vrot.slane %v539, 4
        %v542 = vshll.u32 %v245, 16
        %v544 = vrot.slane %v542, 5
        %v545 = vsel %vm267, %v540, %v544
        %v546 = vshrl.u32 %v245, 16
        %v548 = vrot.slane %v546, 4
        %v549 = vor.u32 %v548, %v544
        %v550 = vrot.slane %v549, 4
        %v552 = vshll.u32 %v246, 16
        %v554 = vrot.slane %v552, 5
        %v555 = vsel %vm267, %v550, %v554
        %v557 = vshrl.u32 %v247, 16
        %v559 = vrot.slane %v557, 4
        %v560 = vshll.u32 %v247, 16
        %v562 = vrot.slane %v560, 5
        %v563 = vor.u32 %v559, %v562
        %v564 = vrot.slane %v563, 4
        %v566 = vshll.u32 %v248, 16
        %v568 = vrot.slane %v566, 5
        %v569 = vsel %vm267, %v564, %v568
        %v570 = vshrl.u32 %v248, 16
        %v572 = vrot.slane %v570, 4
        %v573 = vor.u32 %v572, %v568
        %v574 = vrot.slane %v573, 4
        %v576 = vshll.u32 %v249, 16
        %v578 = vrot.slane %v576, 5
        %v579 = vsel %vm267, %v574, %v578
        %v581 = vshrl.u32 %v250, 16
        %v583 = vrot.slane %v581, 4
        %v584 = vshll.u32 %v250, 16
        %v586 = vrot.slane %v584, 5
        %v587 = vor.u32 %v583, %v586
        %v588 = vrot.slane %v587, 4
        %v590 = vshll.u32 %v251, 16
        %v592 = vrot.slane %v590, 5
        %v593 = vsel %vm267, %v588, %v592
        %v594 = vshrl.u32 %v251, 16
        %v596 = vrot.slane %v594, 4
        %v597 = vor.u32 %v596, %v592
        %v598 = vrot.slane %v597, 4
        %v600 = vshll.u32 %v252, 16
        %v602 = vrot.slane %v600, 5
        %v603 = vsel %vm267, %v598, %v602
        %v605 = vshrl.u32 %v253, 16
        %v607 = vrot.slane %v605, 4
        %v608 = vshll.u32 %v253, 16
        %v610 = vrot.slane %v608, 5
        %v611 = vor.u32 %v607, %v610
        %v612 = vrot.slane %v611, 4
        %v614 = vshll.u32 %v254, 16
        %v616 = vrot.slane %v614, 5
        %v617 = vsel %vm267, %v612, %v616
        %v618 = vshrl.u32 %v254, 16
        %v620 = vrot.slane %v618, 4
        %v621 = vor.u32 %v620, %v616
        %v622 = vrot.slane %v621, 4
        %v624 = vshll.u32 %v255, 16
        %v626 = vrot.slane %v624, 5
        %v627 = vsel %vm267, %v622, %v626
        %v629 = vshrl.u32 %v256, 16
        %v631 = vrot.slane %v629, 4
        %v632 = vshll.u32 %v256, 16
        %v634 = vrot.slane %v632, 5
        %v635 = vor.u32 %v631, %v634
        %v636 = vrot.slane %v635, 4
        %v638 = vshll.u32 %v257, 16
        %v640 = vrot.slane %v638, 5
        %v641 = vsel %vm267, %v636, %v640
        %v642 = vshrl.u32 %v257, 16
        %v644 = vrot.slane %v642, 4
        %v645 = vor.u32 %v644, %v640
        %v646 = vrot.slane %v645, 4
        %v648 = vshll.u32 %v258, 16
        %v650 = vrot.slane %v648, 5
        %v651 = vsel %vm267, %v646, %v650
        %vm700 = vcmask 1042432
        %vm701 = vcmask 1046532
        %vm702 = vmor %vm700, %vm701
        %v703 = vrot.slane %v211, 5
        %v704 = vrot.slane %v703, 4
        %v705 = vrot.slane %v212, 5
        %v706 = vsel %vm702, %v704, %v705
        %v707 = vrot.slane %v705, 4
        %v708 = vrot.slane %v213, 5
        %v709 = vsel %vm702, %v707, %v708
        %v710 = vrot.slane %v214, 5
        %v711 = vrot.slane %v710, 4
        %v712 = vrot.slane %v215, 5
        %v713 = vsel %vm702, %v711, %v712
        %v714 = vrot.slane %v712, 4
        %v715 = vrot.slane %v216, 5
        %v716 = vsel %vm702, %v714, %v715
        %v717 = vrot.slane %v217, 5
        %v718 = vrot.slane %v717, 4
        %v719 = vrot.slane %v218, 5
        %v720 = vsel %vm702, %v718, %v719
        %v721 = vrot.slane %v719, 4
        %v722 = vrot.slane %v219, 5
        %v723 = vsel %vm702, %v721, %v722
        %v724 = vrot.slane %v220, 5
        %v725 = vrot.slane %v724, 4
        %v726 = vrot.slane %v221, 5
        %v727 = vsel %vm702, %v725, %v726
        %v728 = vrot.slane %v726, 4
        %v729 = vrot.slane %v222, 5
        %v730 = vsel %vm702, %v728, %v729
        %v731 = vrot.slane %v223, 5
        %v732 = vrot.slane %v731, 4
        %v733 = vrot.slane %v224, 5
        %v734 = vsel %vm702, %v732, %v733
        %v735 = vrot.slane %v733, 4
        %v736 = vrot.slane %v225, 5
        %v737 = vsel %vm702, %v735, %v736
        %v738 = vrot.slane %v226, 5
        %v739 = vrot.slane %v738, 4
        %v740 = vrot.slane %v227, 5
        %v741 = vsel %vm702, %v739, %v740
        %v742 = vrot.slane %v740, 4
        %v743 = vrot.slane %v228, 5
        %v744 = vsel %vm702, %v742, %v743
        %v745 = vrot.slane %v229, 5
        %v746 = vrot.slane %v745, 4
        %v747 = vrot.slane %v230, 5
        %v748 = vsel %vm702, %v746, %v747
        %v749 = vrot.slane %v747, 4
        %v750 = vrot.slane %v231, 5
        %v751 = vsel %vm702, %v749, %v750
        %v752 = vrot.slane %v232, 5
        %v753 = vrot.slane %v752, 4
        %v754 = vrot.slane %v233, 5
        %v755 = vsel %vm702, %v753, %v754
        %v756 = vrot.slane %v754, 4
        %v757 = vrot.slane %v234, 5
        %v758 = vsel %vm702, %v756, %v757
        %v759 = vrot.slane %v235, 5
        %v760 = vrot.slane %v759, 4
        %v761 = vrot.slane %v236, 5
        %v762 = vsel %vm702, %v760, %v761
        %v763 = vrot.slane %v761, 4
        %v764 = vrot.slane %v237, 5
        %v765 = vsel %vm702, %v763, %v764
        %v766 = vrot.slane %v238, 5
        %v767 = vrot.slane %v766, 4
        %v768 = vrot.slane %v239, 5
        %v769 = vsel %vm702, %v767, %v768
        %v770 = vrot.slane %v768, 4
        %v771 = vrot.slane %v240, 5
        %v772 = vsel %vm702, %v770, %v771
        %v773 = vrot.slane %v241, 5
        %v774 = vrot.slane %v773, 4
        %v775 = vrot.slane %v242, 5
        %v776 = vsel %vm702, %v774, %v775
        %v777 = vrot.slane %v775, 4
        %v778 = vrot.slane %v243, 5
        %v779 = vsel %vm702, %v777, %v778
        %v780 = vrot.slane %v244, 5
        %v781 = vrot.slane %v780, 4
        %v782 = vrot.slane %v245, 5
        %v783 = vsel %vm702, %v781, %v782
        %v784 = vrot.slane %v782, 4
        %v785 = vrot.slane %v246, 5
        %v786 = vsel %vm702, %v784, %v785
        %v787 = vrot.slane %v247, 5
        %v788 = vrot.slane %v787, 4
        %v789 = vrot.slane %v248, 5
        %v790 = vsel %vm702, %v788, %v789
        %v791 = vrot.slane %v789, 4
        %v792 = vrot.slane %v249, 5
        %v793 = vsel %vm702, %v791, %v792
        %v794 = vrot.slane %v250, 5
        %v795 = vrot.slane %v794, 4
        %v796 = vrot.slane %v251, 5
        %v797 = vsel %vm702, %v795, %v796
        %v798 = vrot.slane %v796, 4
        %v799 = vrot.slane %v252, 5
        %v800 = vsel %vm702, %v798, %v799
        %v801 = vrot.slane %v253, 5
        %v802 = vrot.slane %v801, 4
        %v803 = vrot.slane %v254, 5
        %v804 = vsel %vm702, %v802, %v803
        %v805 = vrot.slane %v803, 4
        %v806 = vrot.slane %v255, 5
        %v807 = vsel %vm702, %v805, %v806
        %v808 = vrot.slane %v256, 5
        %v809 = vrot.slane %v808, 4
        %v810 = vrot.slane %v257, 5
        %v811 = vsel %vm702, %v809, %v810
        %v812 = vrot.slane %v810, 4
        %v813 = vrot.slane %v258, 5
        %v814 = vsel %vm702, %v812, %v813
        %v816 = vshrl.u32 %v259, 16
        %v818 = vrot.slane %v816, 4
        %v819 = vshll.u32 %v259, 16
        %v821 = vrot.slane %v819, 5
        %v822 = vor.u32 %v818, %v821
        %v823 = vrot.slane %v822, 4
        %v825 = vshll.u32 %v260, 16
        %v827 = vrot.slane %v825, 5
        %v828 = vsel %vm267, %v823, %v827
        %v829 = vshrl.u32 %v260, 16
        %v831 = vrot.slane %v829, 4
        %v832 = vor.u32 %v831, %v827
        %v833 = vrot.slane %v832, 4
        %v835 = vshll.u32 %v261, 16
        %v837 = vrot.slane %v835, 5
        %v838 = vsel %vm267, %v833, %v837
        %v842 = vrot.slane %v259, 5
        %v843 = vrot.slane %v842, 4
        %v844 = vrot.slane %v260, 5
        %v845 = vsel %vm702, %v843, %v844
        %v846 = vrot.slane %v844, 4
        %v847 = vrot.slane %v261, 5
        %v848 = vsel %vm702, %v846, %v847
        %v850 = vshrl.u32 %v262, 16
        %v852 = vrot.slane %v850, 4
        %v853 = vshll.u32 %v262, 16
        %v855 = vrot.slane %v853, 5
        %v856 = vor.u32 %v852, %v855
        %v857 = vrot.slane %v856, 4
        %v859 = vshll.u32 %v263, 16
        %v861 = vrot.slane %v859, 5
        %v862 = vsel %vm267, %v857, %v861
        %v863 = vshrl.u32 %v263, 16
        %v865 = vrot.slane %v863, 4
        %v866 = vor.u32 %v865, %v861
        %v867 = vrot.slane %v866, 4
        %v869 = vshll.u32 %v264, 16
        %v871 = vrot.slane %v869, 5
        %v872 = vsel %vm267, %v867, %v871
        %v876 = vrot.slane %v262, 5
        %v877 = vrot.slane %v876, 4
        %v878 = vrot.slane %v263, 5
        %v879 = vsel %vm702, %v877, %v878
        %v880 = vrot.slane %v878, 4
        %v881 = vrot.slane %v264, 5
        %v882 = vsel %vm702, %v880, %v881
        %v883 = vunpack.c.l.b16 %v211
        %v884 = vunpack.c.l.b16 %v212
        %v885 = vunpack.c.l.b16 %v214
        %v886 = vunpack.c.l.b16 %v215
        %v887 = vunpack.c.l.b16 %v217
        %v888 = vunpack.c.l.b16 %v218
        %v889 = vunpack.c.l.b16 %v220
        %v890 = vunpack.c.l.b16 %v221
        %v891 = vunpack.c.l.b16 %v223
        %v892 = vunpack.c.l.b16 %v224
        %v893 = vunpack.c.l.b16 %v226
        %v894 = vunpack.c.l.b16 %v227
        %v895 = vunpack.c.l.b16 %v229
        %v896 = vunpack.c.l.b16 %v230
        %v897 = vunpack.c.l.b16 %v232
        %v898 = vunpack.c.l.b16 %v233
        %v899 = vunpack.c.l.b16 %v235
        %v900 = vunpack.c.l.b16 %v236
        %v901 = vunpack.c.l.b16 %v238
        %v902 = vunpack.c.l.b16 %v239
        %v903 = vunpack.c.l.b16 %v241
        %v904 = vunpack.c.l.b16 %v242
        %v905 = vunpack.c.l.b16 %v244
        %v906 = vunpack.c.l.b16 %v245
        %v907 = vunpack.c.l.b16 %v247
        %v908 = vunpack.c.l.b16 %v248
        %v909 = vunpack.c.l.b16 %v250
        %v910 = vunpack.c.l.b16 %v251
        %v911 = vunpack.c.l.b16 %v253
        %v912 = vunpack.c.l.b16 %v254
        %v913 = vunpack.c.l.b16 %v256
        %v914 = vunpack.c.l.b16 %v257
        %v915 = vpack.c.b16 %v884, %v883
        %v916 = vpack.c.b16 %v886, %v885
        %v917 = vpack.c.b16 %v888, %v887
        %v918 = vpack.c.b16 %v890, %v889
        %v919 = vpack.c.b16 %v892, %v891
        %v920 = vpack.c.b16 %v894, %v893
        %v921 = vpack.c.b16 %v896, %v895
        %v922 = vpack.c.b16 %v898, %v897
        %v923 = vpack.c.b16 %v900, %v899
        %v924 = vpack.c.b16 %v902, %v901
        %v925 = vpack.c.b16 %v904, %v903
        %v926 = vpack.c.b16 %v906, %v905
        %v927 = vpack.c.b16 %v908, %v907
        %v928 = vpack.c.b16 %v910, %v909
        %v929 = vpack.c.b16 %v912, %v911
        %v930 = vpack.c.b16 %v914, %v913
        %v931 = vunpack.c.l.b16 %v281
        %v932 = vunpack.c.l.b16 %v291
        %v933 = vunpack.c.l.b16 %v305
        %v934 = vunpack.c.l.b16 %v315
        %v935 = vunpack.c.l.b16 %v329
        %v936 = vunpack.c.l.b16 %v339
        %v937 = vunpack.c.l.b16 %v353
        %v938 = vunpack.c.l.b16 %v363
        %v939 = vunpack.c.l.b16 %v377
        %v940 = vunpack.c.l.b16 %v387
        %v941 = vunpack.c.l.b16 %v401
        %v942 = vunpack.c.l.b16 %v411
        %v943 = vunpack.c.l.b16 %v425
        %v944 = vunpack.c.l.b16 %v435
        %v945 = vunpack.c.l.b16 %v449
        %v946 = vunpack.c.l.b16 %v459
        %v947 = vunpack.c.l.b16 %v473
        %v948 = vunpack.c.l.b16 %v483
        %v949 = vunpack.c.l.b16 %v497
        %v950 = vunpack.c.l.b16 %v507
        %v951 = vunpack.c.l.b16 %v521
        %v952 = vunpack.c.l.b16 %v531
        %v953 = vunpack.c.l.b16 %v545
        %v954 = vunpack.c.l.b16 %v555
        %v955 = vunpack.c.l.b16 %v569
        %v956 = vunpack.c.l.b16 %v579
        %v957 = vunpack.c.l.b16 %v593
        %v958 = vunpack.c.l.b16 %v603
        %v959 = vunpack.c.l.b16 %v617
        %v960 = vunpack.c.l.b16 %v627
        %v961 = vunpack.c.l.b16 %v641
        %v962 = vunpack.c.l.b16 %v651
        %v963 = vpack.c.b16 %v932, %v931
        %v964 = vpack.c.b16 %v934, %v933
        %v965 = vpack.c.b16 %v936, %v935
        %v966 = vpack.c.b16 %v938, %v937
        %v967 = vpack.c.b16 %v940, %v939
        %v968 = vpack.c.b16 %v942, %v941
        %v969 = vpack.c.b16 %v944, %v943
        %v970 = vpack.c.b16 %v946, %v945
        %v971 = vpack.c.b16 %v948, %v947
        %v972 = vpack.c.b16 %v950, %v949
        %v973 = vpack.c.b16 %v952, %v951
        %v974 = vpack.c.b16 %v954, %v953
        %v975 = vpack.c.b16 %v956, %v955
        %v976 = vpack.c.b16 %v958, %v957
        %v977 = vpack.c.b16 %v960, %v959
        %v978 = vpack.c.b16 %v962, %v961
        %979 = vrot.lane.b32.xlu0 %v963, 4
        %v980 = vpop.permute.xlu0 %979
        %981 = vrot.lane.b32.xlu0 %v964, 4
        %v982 = vpop.permute.xlu0 %981
        %983 = vrot.lane.b32.xlu0 %v965, 4
        %v984 = vpop.permute.xlu0 %983
        %985 = vrot.lane.b32.xlu0 %v966, 4
        %v986 = vpop.permute.xlu0 %985
        %987 = vrot.lane.b32.xlu0 %v967, 4
        %v988 = vpop.permute.xlu0 %987
        %989 = vrot.lane.b32.xlu0 %v968, 4
        %v990 = vpop.permute.xlu0 %989
        %991 = vrot.lane.b32.xlu0 %v969, 4
        %v992 = vpop.permute.xlu0 %991
        %993 = vrot.lane.b32.xlu0 %v970, 4
        %v994 = vpop.permute.xlu0 %993
        %995 = vrot.lane.b32.xlu0 %v971, 4
        %v996 = vpop.permute.xlu0 %995
        %997 = vrot.lane.b32.xlu0 %v972, 4
        %v998 = vpop.permute.xlu0 %997
        %999 = vrot.lane.b32.xlu0 %v973, 4
        %v1000 = vpop.permute.xlu0 %999
        %1001 = vrot.lane.b32.xlu0 %v974, 4
        %v1002 = vpop.permute.xlu0 %1001
        %1003 = vrot.lane.b32.xlu0 %v975, 4
        %v1004 = vpop.permute.xlu0 %1003
        %1005 = vrot.lane.b32.xlu0 %v976, 4
        %v1006 = vpop.permute.xlu0 %1005
        %1007 = vrot.lane.b32.xlu0 %v977, 4
        %v1008 = vpop.permute.xlu0 %1007
        %1009 = vrot.lane.b32.xlu0 %v978, 4
        %v1010 = vpop.permute.xlu0 %1009
        %v1011 = vunpack.c.l.b16 %v706
        %v1012 = vunpack.c.l.b16 %v709
        %v1013 = vunpack.c.l.b16 %v713
        %v1014 = vunpack.c.l.b16 %v716
        %v1015 = vunpack.c.l.b16 %v720
        %v1016 = vunpack.c.l.b16 %v723
        %v1017 = vunpack.c.l.b16 %v727
        %v1018 = vunpack.c.l.b16 %v730
        %v1019 = vunpack.c.l.b16 %v734
        %v1020 = vunpack.c.l.b16 %v737
        %v1021 = vunpack.c.l.b16 %v741
        %v1022 = vunpack.c.l.b16 %v744
        %v1023 = vunpack.c.l.b16 %v748
        %v1024 = vunpack.c.l.b16 %v751
        %v1025 = vunpack.c.l.b16 %v755
        %v1026 = vunpack.c.l.b16 %v758
        %v1027 = vunpack.c.l.b16 %v762
        %v1028 = vunpack.c.l.b16 %v765
        %v1029 = vunpack.c.l.b16 %v769
        %v1030 = vunpack.c.l.b16 %v772
        %v1031 = vunpack.c.l.b16 %v776
        %v1032 = vunpack.c.l.b16 %v779
        %v1033 = vunpack.c.l.b16 %v783
        %v1034 = vunpack.c.l.b16 %v786
        %v1035 = vunpack.c.l.b16 %v790
        %v1036 = vunpack.c.l.b16 %v793
        %v1037 = vunpack.c.l.b16 %v797
        %v1038 = vunpack.c.l.b16 %v800
        %v1039 = vunpack.c.l.b16 %v804
        %v1040 = vunpack.c.l.b16 %v807
        %v1041 = vunpack.c.l.b16 %v811
        %v1042 = vunpack.c.l.b16 %v814
        %v1043 = vpack.c.b16 %v1012, %v1011
        %v1044 = vpack.c.b16 %v1014, %v1013
        %v1045 = vpack.c.b16 %v1016, %v1015
        %v1046 = vpack.c.b16 %v1018, %v1017
        %v1047 = vpack.c.b16 %v1020, %v1019
        %v1048 = vpack.c.b16 %v1022, %v1021
        %v1049 = vpack.c.b16 %v1024, %v1023
        %v1050 = vpack.c.b16 %v1026, %v1025
        %v1051 = vpack.c.b16 %v1028, %v1027
        %v1052 = vpack.c.b16 %v1030, %v1029
        %v1053 = vpack.c.b16 %v1032, %v1031
        %v1054 = vpack.c.b16 %v1034, %v1033
        %v1055 = vpack.c.b16 %v1036, %v1035
        %v1056 = vpack.c.b16 %v1038, %v1037
        %v1057 = vpack.c.b16 %v1040, %v1039
        %v1058 = vpack.c.b16 %v1042, %v1041
        %1059 = vrot.lane.b32.xlu0 %v1043, 8
        %v1060 = vpop.permute.xlu0 %1059
        %1061 = vrot.lane.b32.xlu0 %v1044, 8
        %v1062 = vpop.permute.xlu0 %1061
        %1063 = vrot.lane.b32.xlu0 %v1045, 8
        %v1064 = vpop.permute.xlu0 %1063
        %1065 = vrot.lane.b32.xlu0 %v1046, 8
        %v1066 = vpop.permute.xlu0 %1065
        %1067 = vrot.lane.b32.xlu0 %v1047, 8
        %v1068 = vpop.permute.xlu0 %1067
        %1069 = vrot.lane.b32.xlu0 %v1048, 8
        %v1070 = vpop.permute.xlu0 %1069
        %1071 = vrot.lane.b32.xlu0 %v1049, 8
        %v1072 = vpop.permute.xlu0 %1071
        %1073 = vrot.lane.b32.xlu0 %v1050, 8
        %v1074 = vpop.permute.xlu0 %1073
        %1075 = vrot.lane.b32.xlu0 %v1051, 8
        %v1076 = vpop.permute.xlu0 %1075
        %1077 = vrot.lane.b32.xlu0 %v1052, 8
        %v1078 = vpop.permute.xlu0 %1077
        %1079 = vrot.lane.b32.xlu0 %v1053, 8
        %v1080 = vpop.permute.xlu0 %1079
        %1081 = vrot.lane.b32.xlu0 %v1054, 8
        %v1082 = vpop.permute.xlu0 %1081
        %1083 = vrot.lane.b32.xlu0 %v1055, 8
        %v1084 = vpop.permute.xlu0 %1083
        %1085 = vrot.lane.b32.xlu0 %v1056, 8
        %v1086 = vpop.permute.xlu0 %1085
        %1087 = vrot.lane.b32.xlu0 %v1057, 8
        %v1088 = vpop.permute.xlu0 %1087
        %1089 = vrot.lane.b32.xlu0 %v1058, 8
        %v1090 = vpop.permute.xlu0 %1089
        %v1091 = vunpack.c.l.b16 %v259
        %v1092 = vunpack.c.l.b16 %v260
        %v1093 = vpack.c.b16 %v1092, %v1091
        %1094 = vrot.lane.b32.xlu0 %v916, 12
        %v1095 = vpop.permute.xlu0 %1094
        %1096 = vrot.lane.b32.xlu0 %v917, 12
        %v1097 = vpop.permute.xlu0 %1096
        %1098 = vrot.lane.b32.xlu0 %v918, 12
        %v1099 = vpop.permute.xlu0 %1098
        %1100 = vrot.lane.b32.xlu0 %v919, 12
        %v1101 = vpop.permute.xlu0 %1100
        %1102 = vrot.lane.b32.xlu0 %v920, 12
        %v1103 = vpop.permute.xlu0 %1102
        %1104 = vrot.lane.b32.xlu0 %v921, 12
        %v1105 = vpop.permute.xlu0 %1104
        %1106 = vrot.lane.b32.xlu0 %v922, 12
        %v1107 = vpop.permute.xlu0 %1106
        %1108 = vrot.lane.b32.xlu0 %v923, 12
        %v1109 = vpop.permute.xlu0 %1108
        %1110 = vrot.lane.b32.xlu0 %v924, 12
        %v1111 = vpop.permute.xlu0 %1110
        %1112 = vrot.lane.b32.xlu0 %v925, 12
        %v1113 = vpop.permute.xlu0 %1112
        %1114 = vrot.lane.b32.xlu0 %v926, 12
        %v1115 = vpop.permute.xlu0 %1114
        %1116 = vrot.lane.b32.xlu0 %v927, 12
        %v1117 = vpop.permute.xlu0 %1116
        %1118 = vrot.lane.b32.xlu0 %v928, 12
        %v1119 = vpop.permute.xlu0 %1118
        %1120 = vrot.lane.b32.xlu0 %v929, 12
        %v1121 = vpop.permute.xlu0 %1120
        %1122 = vrot.lane.b32.xlu0 %v930, 12
        %v1123 = vpop.permute.xlu0 %1122
        %1124 = vrot.lane.b32.xlu0 %v1093, 12
        %v1125 = vpop.permute.xlu0 %1124
        %v1126 = vunpack.c.l.b16 %v828
        %v1127 = vunpack.c.l.b16 %v838
        %v1128 = vpack.c.b16 %v1127, %v1126
        %1129 = vrot.lane.b32.xlu0 %v964, 16
        %v1130 = vpop.permute.xlu0 %1129
        %1131 = vrot.lane.b32.xlu0 %v965, 16
        %v1132 = vpop.permute.xlu0 %1131
        %1133 = vrot.lane.b32.xlu0 %v966, 16
        %v1134 = vpop.permute.xlu0 %1133
        %1135 = vrot.lane.b32.xlu0 %v967, 16
        %v1136 = vpop.permute.xlu0 %1135
        %1137 = vrot.lane.b32.xlu0 %v968, 16
        %v1138 = vpop.permute.xlu0 %1137
        %1139 = vrot.lane.b32.xlu0 %v969, 16
        %v1140 = vpop.permute.xlu0 %1139
        %1141 = vrot.lane.b32.xlu0 %v970, 16
        %v1142 = vpop.permute.xlu0 %1141
        %1143 = vrot.lane.b32.xlu0 %v971, 16
        %v1144 = vpop.permute.xlu0 %1143
        %1145 = vrot.lane.b32.xlu0 %v972, 16
        %v1146 = vpop.permute.xlu0 %1145
        %1147 = vrot.lane.b32.xlu0 %v973, 16
        %v1148 = vpop.permute.xlu0 %1147
        %1149 = vrot.lane.b32.xlu0 %v974, 16
        %v1150 = vpop.permute.xlu0 %1149
        %1151 = vrot.lane.b32.xlu0 %v975, 16
        %v1152 = vpop.permute.xlu0 %1151
        %1153 = vrot.lane.b32.xlu0 %v976, 16
        %v1154 = vpop.permute.xlu0 %1153
        %1155 = vrot.lane.b32.xlu0 %v977, 16
        %v1156 = vpop.permute.xlu0 %1155
        %1157 = vrot.lane.b32.xlu0 %v978, 16
        %v1158 = vpop.permute.xlu0 %1157
        %1159 = vrot.lane.b32.xlu0 %v1128, 16
        %v1160 = vpop.permute.xlu0 %1159
        %v1161 = vunpack.c.l.b16 %v845
        %v1162 = vunpack.c.l.b16 %v848
        %v1163 = vpack.c.b16 %v1162, %v1161
        %1164 = vrot.lane.b32.xlu0 %v1044, 20
        %v1165 = vpop.permute.xlu0 %1164
        %1166 = vrot.lane.b32.xlu0 %v1045, 20
        %v1167 = vpop.permute.xlu0 %1166
        %1168 = vrot.lane.b32.xlu0 %v1046, 20
        %v1169 = vpop.permute.xlu0 %1168
        %1170 = vrot.lane.b32.xlu0 %v1047, 20
        %v1171 = vpop.permute.xlu0 %1170
        %1172 = vrot.lane.b32.xlu0 %v1048, 20
        %v1173 = vpop.permute.xlu0 %1172
        %1174 = vrot.lane.b32.xlu0 %v1049, 20
        %v1175 = vpop.permute.xlu0 %1174
        %1176 = vrot.lane.b32.xlu0 %v1050, 20
        %v1177 = vpop.permute.xlu0 %1176
        %1178 = vrot.lane.b32.xlu0 %v1051, 20
        %v1179 = vpop.permute.xlu0 %1178
        %1180 = vrot.lane.b32.xlu0 %v1052, 20
        %v1181 = vpop.permute.xlu0 %1180
        %1182 = vrot.lane.b32.xlu0 %v1053, 20
        %v1183 = vpop.permute.xlu0 %1182
        %1184 = vrot.lane.b32.xlu0 %v1054, 20
        %v1185 = vpop.permute.xlu0 %1184
        %1186 = vrot.lane.b32.xlu0 %v1055, 20
        %v1187 = vpop.permute.xlu0 %1186
        %1188 = vrot.lane.b32.xlu0 %v1056, 20
        %v1189 = vpop.permute.xlu0 %1188
        %1190 = vrot.lane.b32.xlu0 %v1057, 20
        %v1191 = vpop.permute.xlu0 %1190
        %1192 = vrot.lane.b32.xlu0 %v1058, 20
        %v1193 = vpop.permute.xlu0 %1192
        %1194 = vrot.lane.b32.xlu0 %v1163, 20
        %v1195 = vpop.permute.xlu0 %1194
        %v1196 = vunpack.c.l.b16 %v262
        %v1197 = vunpack.c.l.b16 %v263
        %v1198 = vpack.c.b16 %v1197, %v1196
        %1199 = vrot.lane.b32.xlu0 %v917, 24
        %v1200 = vpop.permute.xlu0 %1199
        %1201 = vrot.lane.b32.xlu0 %v918, 24
        %v1202 = vpop.permute.xlu0 %1201
        %1203 = vrot.lane.b32.xlu0 %v919, 24
        %v1204 = vpop.permute.xlu0 %1203
        %1205 = vrot.lane.b32.xlu0 %v920, 24
        %v1206 = vpop.permute.xlu0 %1205
        %1207 = vrot.lane.b32.xlu0 %v921, 24
        %v1208 = vpop.permute.xlu0 %1207
        %1209 = vrot.lane.b32.xlu0 %v922, 24
        %v1210 = vpop.permute.xlu0 %1209
        %1211 = vrot.lane.b32.xlu0 %v923, 24
        %v1212 = vpop.permute.xlu0 %1211
        %1213 = vrot.lane.b32.xlu0 %v924, 24
        %v1214 = vpop.permute.xlu0 %1213
        %1215 = vrot.lane.b32.xlu0 %v925, 24
        %v1216 = vpop.permute.xlu0 %1215
        %1217 = vrot.lane.b32.xlu0 %v926, 24
        %v1218 = vpop.permute.xlu0 %1217
        %1219 = vrot.lane.b32.xlu0 %v927, 24
        %v1220 = vpop.permute.xlu0 %1219
        %1221 = vrot.lane.b32.xlu0 %v928, 24
        %v1222 = vpop.permute.xlu0 %1221
        %1223 = vrot.lane.b32.xlu0 %v929, 24
        %v1224 = vpop.permute.xlu0 %1223
        %1225 = vrot.lane.b32.xlu0 %v930, 24
        %v1226 = vpop.permute.xlu0 %1225
        %1227 = vrot.lane.b32.xlu0 %v1093, 24
        %v1228 = vpop.permute.xlu0 %1227
        %1229 = vrot.lane.b32.xlu0 %v1198, 24
        %v1230 = vpop.permute.xlu0 %1229
        %v1231 = vunpack.c.l.b16 %v862
        %v1232 = vunpack.c.l.b16 %v872
        %v1233 = vpack.c.b16 %v1232, %v1231
        %1234 = vrot.lane.b32.xlu0 %v965, 28
        %v1235 = vpop.permute.xlu0 %1234
        %1236 = vrot.lane.b32.xlu0 %v966, 28
        %v1237 = vpop.permute.xlu0 %1236
        %1238 = vrot.lane.b32.xlu0 %v967, 28
        %v1239 = vpop.permute.xlu0 %1238
        %1240 = vrot.lane.b32.xlu0 %v968, 28
        %v1241 = vpop.permute.xlu0 %1240
        %1242 = vrot.lane.b32.xlu0 %v969, 28
        %v1243 = vpop.permute.xlu0 %1242
        %1244 = vrot.lane.b32.xlu0 %v970, 28
        %v1245 = vpop.permute.xlu0 %1244
        %1246 = vrot.lane.b32.xlu0 %v971, 28
        %v1247 = vpop.permute.xlu0 %1246
        %1248 = vrot.lane.b32.xlu0 %v972, 28
        %v1249 = vpop.permute.xlu0 %1248
        %1250 = vrot.lane.b32.xlu0 %v973, 28
        %v1251 = vpop.permute.xlu0 %1250
        %1252 = vrot.lane.b32.xlu0 %v974, 28
        %v1253 = vpop.permute.xlu0 %1252
        %1254 = vrot.lane.b32.xlu0 %v975, 28
        %v1255 = vpop.permute.xlu0 %1254
        %1256 = vrot.lane.b32.xlu0 %v976, 28
        %v1257 = vpop.permute.xlu0 %1256
        %1258 = vrot.lane.b32.xlu0 %v977, 28
        %v1259 = vpop.permute.xlu0 %1258
        %1260 = vrot.lane.b32.xlu0 %v978, 28
        %v1261 = vpop.permute.xlu0 %1260
        %1262 = vrot.lane.b32.xlu0 %v1128, 28
        %v1263 = vpop.permute.xlu0 %1262
        %1264 = vrot.lane.b32.xlu0 %v1233, 28
        %v1265 = vpop.permute.xlu0 %1264
        %v1266 = vunpack.c.l.b16 %v879
        %v1267 = vunpack.c.l.b16 %v882
        %v1268 = vpack.c.b16 %v1267, %v1266
        %1269 = vrot.lane.b32.xlu0 %v1045, 32
        %v1270 = vpop.permute.xlu0 %1269
        %1271 = vrot.lane.b32.xlu0 %v1046, 32
        %v1272 = vpop.permute.xlu0 %1271
        %1273 = vrot.lane.b32.xlu0 %v1047, 32
        %v1274 = vpop.permute.xlu0 %1273
        %1275 = vrot.lane.b32.xlu0 %v1048, 32
        %v1276 = vpop.permute.xlu0 %1275
        %1277 = vrot.lane.b32.xlu0 %v1049, 32
        %v1278 = vpop.permute.xlu0 %1277
        %1279 = vrot.lane.b32.xlu0 %v1050, 32
        %v1280 = vpop.permute.xlu0 %1279
        %1281 = vrot.lane.b32.xlu0 %v1051, 32
        %v1282 = vpop.permute.xlu0 %1281
        %1283 = vrot.lane.b32.xlu0 %v1052, 32
        %v1284 = vpop.permute.xlu0 %1283
        %1285 = vrot.lane.b32.xlu0 %v1053, 32
        %v1286 = vpop.permute.xlu0 %1285
        %1287 = vrot.lane.b32.xlu0 %v1054, 32
        %v1288 = vpop.permute.xlu0 %1287
        %1289 = vrot.lane.b32.xlu0 %v1055, 32
        %v1290 = vpop.permute.xlu0 %1289
        %1291 = vrot.lane.b32.xlu0 %v1056, 32
        %v1292 = vpop.permute.xlu0 %1291
        %1293 = vrot.lane.b32.xlu0 %v1057, 32
        %v1294 = vpop.permute.xlu0 %1293
        %1295 = vrot.lane.b32.xlu0 %v1058, 32
        %v1296 = vpop.permute.xlu0 %1295
        %1297 = vrot.lane.b32.xlu0 %v1163, 32
        %v1298 = vpop.permute.xlu0 %1297
        %1299 = vrot.lane.b32.xlu0 %v1268, 32
        %v1300 = vpop.permute.xlu0 %1299
        %vm1301 = vcmask 31744
        %v1304 = vsel %vm1301, %v915, %v980
        %v1307 = vsel %vm1301, %v916, %v982
        %v1310 = vsel %vm1301, %v917, %v984
        %v1313 = vsel %vm1301, %v918, %v986
        %v1316 = vsel %vm1301, %v919, %v988
        %v1319 = vsel %vm1301, %v920, %v990
        %v1322 = vsel %vm1301, %v921, %v992
        %v1325 = vsel %vm1301, %v922, %v994
        %v1328 = vsel %vm1301, %v923, %v996
        %v1331 = vsel %vm1301, %v924, %v998
        %v1334 = vsel %vm1301, %v925, %v1000
        %v1337 = vsel %vm1301, %v926, %v1002
        %v1340 = vsel %vm1301, %v927, %v1004
        %v1343 = vsel %vm1301, %v928, %v1006
        %v1346 = vsel %vm1301, %v929, %v1008
        %v1349 = vsel %vm1301, %v930, %v1010
        %vm1350 = vcmask 64512
        %v1352 = vsel %vm1350, %v1304, %v1060
        %v1354 = vsel %vm1350, %v1307, %v1062
        %v1356 = vsel %vm1350, %v1310, %v1064
        %v1358 = vsel %vm1350, %v1313, %v1066
        %v1360 = vsel %vm1350, %v1316, %v1068
        %v1362 = vsel %vm1350, %v1319, %v1070
        %v1364 = vsel %vm1350, %v1322, %v1072
        %v1366 = vsel %vm1350, %v1325, %v1074
        %v1368 = vsel %vm1350, %v1328, %v1076
        %v1370 = vsel %vm1350, %v1331, %v1078
        %v1372 = vsel %vm1350, %v1334, %v1080
        %v1374 = vsel %vm1350, %v1337, %v1082
        %v1376 = vsel %vm1350, %v1340, %v1084
        %v1378 = vsel %vm1350, %v1343, %v1086
        %v1380 = vsel %vm1350, %v1346, %v1088
        %v1382 = vsel %vm1350, %v1349, %v1090
        %vm1383 = vcmask 97280
        %v1385 = vsel %vm1383, %v1352, %v1095
        %v1387 = vsel %vm1383, %v1354, %v1097
        %v1389 = vsel %vm1383, %v1356, %v1099
        %v1391 = vsel %vm1383, %v1358, %v1101
        %v1393 = vsel %vm1383, %v1360, %v1103
        %v1395 = vsel %vm1383, %v1362, %v1105
        %v1397 = vsel %vm1383, %v1364, %v1107
        %v1399 = vsel %vm1383, %v1366, %v1109
        %v1401 = vsel %vm1383, %v1368, %v1111
        %v1403 = vsel %vm1383, %v1370, %v1113
        %v1405 = vsel %vm1383, %v1372, %v1115
        %v1407 = vsel %vm1383, %v1374, %v1117
        %v1409 = vsel %vm1383, %v1376, %v1119
        %v1411 = vsel %vm1383, %v1378, %v1121
        %v1413 = vsel %vm1383, %v1380, %v1123
        %v1415 = vsel %vm1383, %v1382, %v1125
        %vm1416 = vcmask 130048
        %v1418 = vsel %vm1416, %v1385, %v1130
        %v1420 = vsel %vm1416, %v1387, %v1132
        %v1422 = vsel %vm1416, %v1389, %v1134
        %v1424 = vsel %vm1416, %v1391, %v1136
        %v1426 = vsel %vm1416, %v1393, %v1138
        %v1428 = vsel %vm1416, %v1395, %v1140
        %v1430 = vsel %vm1416, %v1397, %v1142
        %v1432 = vsel %vm1416, %v1399, %v1144
        %v1434 = vsel %vm1416, %v1401, %v1146
        %v1436 = vsel %vm1416, %v1403, %v1148
        %v1438 = vsel %vm1416, %v1405, %v1150
        %v1440 = vsel %vm1416, %v1407, %v1152
        %v1442 = vsel %vm1416, %v1409, %v1154
        %v1444 = vsel %vm1416, %v1411, %v1156
        %v1446 = vsel %vm1416, %v1413, %v1158
        %v1448 = vsel %vm1416, %v1415, %v1160
        %vm1449 = vcmask 162816
        %v1451 = vsel %vm1449, %v1418, %v1165
        %v1453 = vsel %vm1449, %v1420, %v1167
        %v1455 = vsel %vm1449, %v1422, %v1169
        %v1457 = vsel %vm1449, %v1424, %v1171
        %v1459 = vsel %vm1449, %v1426, %v1173
        %v1461 = vsel %vm1449, %v1428, %v1175
        %v1463 = vsel %vm1449, %v1430, %v1177
        %v1465 = vsel %vm1449, %v1432, %v1179
        %v1467 = vsel %vm1449, %v1434, %v1181
        %v1469 = vsel %vm1449, %v1436, %v1183
        %v1471 = vsel %vm1449, %v1438, %v1185
        %v1473 = vsel %vm1449, %v1440, %v1187
        %v1475 = vsel %vm1449, %v1442, %v1189
        %v1477 = vsel %vm1449, %v1444, %v1191
        %v1479 = vsel %vm1449, %v1446, %v1193
        %v1481 = vsel %vm1449, %v1448, %v1195
        %vm1482 = vcmask 195584
        %v1484 = vsel %vm1482, %v1451, %v1200
        %v1486 = vsel %vm1482, %v1453, %v1202
        %v1488 = vsel %vm1482, %v1455, %v1204
        %v1490 = vsel %vm1482, %v1457, %v1206
        %v1492 = vsel %vm1482, %v1459, %v1208
        %v1494 = vsel %vm1482, %v1461, %v1210
        %v1496 = vsel %vm1482, %v1463, %v1212
        %v1498 = vsel %vm1482, %v1465, %v1214
        %v1500 = vsel %vm1482, %v1467, %v1216
        %v1502 = vsel %vm1482, %v1469, %v1218
        %v1504 = vsel %vm1482, %v1471, %v1220
        %v1506 = vsel %vm1482, %v1473, %v1222
        %v1508 = vsel %vm1482, %v1475, %v1224
        %v1510 = vsel %vm1482, %v1477, %v1226
        %v1512 = vsel %vm1482, %v1479, %v1228
        %v1514 = vsel %vm1482, %v1481, %v1230
        %vm1515 = vcmask 228352
        %v1517 = vsel %vm1515, %v1484, %v1235
        %v1519 = vsel %vm1515, %v1486, %v1237
        %v1521 = vsel %vm1515, %v1488, %v1239
        %v1523 = vsel %vm1515, %v1490, %v1241
        %v1525 = vsel %vm1515, %v1492, %v1243
        %v1527 = vsel %vm1515, %v1494, %v1245
        %v1529 = vsel %vm1515, %v1496, %v1247
        %v1531 = vsel %vm1515, %v1498, %v1249
        %v1533 = vsel %vm1515, %v1500, %v1251
        %v1535 = vsel %vm1515, %v1502, %v1253
        %v1537 = vsel %vm1515, %v1504, %v1255
        %v1539 = vsel %vm1515, %v1506, %v1257
        %v1541 = vsel %vm1515, %v1508, %v1259
        %v1543 = vsel %vm1515, %v1510, %v1261
        %v1545 = vsel %vm1515, %v1512, %v1263
        %v1547 = vsel %vm1515, %v1514, %v1265
        %vm1548 = vcmask 261120
        %v1550 = vsel %vm1548, %v1517, %v1270
        %v1552 = vsel %vm1548, %v1519, %v1272
        %v1554 = vsel %vm1548, %v1521, %v1274
        %v1556 = vsel %vm1548, %v1523, %v1276
        %v1558 = vsel %vm1548, %v1525, %v1278
        %v1560 = vsel %vm1548, %v1527, %v1280
        %v1562 = vsel %vm1548, %v1529, %v1282
        %v1564 = vsel %vm1548, %v1531, %v1284
        %v1566 = vsel %vm1548, %v1533, %v1286
        %v1568 = vsel %vm1548, %v1535, %v1288
        %v1570 = vsel %vm1548, %v1537, %v1290
        %v1572 = vsel %vm1548, %v1539, %v1292
        %v1574 = vsel %vm1548, %v1541, %v1294
        %v1576 = vsel %vm1548, %v1543, %v1296
        %v1578 = vsel %vm1548, %v1545, %v1298
        %v1580 = vsel %vm1548, %v1547, %v1300
        %v1581 = vld [vmem:[%s1] sm:$0xf]
        %v1582 = vld [vmem:[%s1 + $0x4] sm:$0xf]
        %v1583 = vld [vmem:[%s1 + $0x8] sm:$0xf]
        %v1584 = vld [vmem:[%s1 + $0xc] sm:$0xf]
        %v1585 = vld [vmem:[%s1 + $0x10] sm:$0x3]
        %v1591 = vunpack.c.l.b16 %v1581
        %v1592 = vunpack.c.l.b16 %v1582
        %v1593 = vunpack.c.l.b16 %v1583
        %v1594 = vunpack.c.l.b16 %v1584
        %v1595 = vunpack.c.l.b16 %v1585
        %v1596 = vpack.c.b16 %v1592, %v1591
        %v1597 = vpack.c.b16 %v1594, %v1593
        %v1598 = vpack.c.b16 %v1595, %v1595
        %vm1601 = vcmask 293888
        %v1602 = vsel %vm1601, %v1550, 0
        %v1604 = vsel %vm1601, %v1552, 0
        %v1606 = vsel %vm1601, %v1554, 0
        %v1608 = vsel %vm1601, %v1556, 0
        %v1610 = vsel %vm1601, %v1558, 0
        %v1612 = vsel %vm1601, %v1560, 0
        %v1614 = vsel %vm1601, %v1562, 0
        %v1616 = vsel %vm1601, %v1564, 0
        %v1618 = vsel %vm1601, %v1566, 0
        %v1620 = vsel %vm1601, %v1568, 0
        %v1622 = vsel %vm1601, %v1570, 0
        %v1624 = vsel %vm1601, %v1572, 0
        %v1626 = vsel %vm1601, %v1574, 0
        %v1628 = vsel %vm1601, %v1576, 0
        %v1630 = vsel %vm1601, %v1578, 0
        %v1632 = vsel %vm1601, %v1580, 0
        %vm1634 = vcmask 1041408
        %v1636 = vsel %vm1634, %v1598, 0
        %1638 = vmatprep.subr.bf16.mxu0 0
        %1639 = vmatpush1.bf16.msra.mxu0 %v1596
        %1640 = vmatprep.subr.bf16.mxu0 0
        %1641 = vmatpush1.bf16.msra.mxu0 %v1597
        %1642 = vmatprep.subr.bf16.mxu0 0
        %1643 = vmatpush1.bf16.msra.mxu0 %v1636
        %1644 = vmatprep.subr.bf16.mxu0 0
        %1645 = vmatpush1.bf16.msra.mxu0 0
        %1646 = vmatprep.subr.bf16.mxu0 0
        %1647 = vmatpush1.bf16.msra.mxu0 0
        %1648 = vmatprep.subr.bf16.mxu0 0
        %1649 = vmatpush1.bf16.msra.mxu0 0
        %1650 = vmatprep.subr.bf16.mxu0 0
        %1651 = vmatpush1.bf16.msra.mxu0 0
        %1652 = vmatprep.subr.bf16.mxu0 0
        %1653 = vmatpush1.bf16.msra.mxu0 0
        %1654 = vmatprep.subr.bf16.mxu0 0
        %1655 = vmatpush1.bf16.msra.mxu0 0
        %1656 = vmatprep.subr.bf16.mxu0 0
        %1657 = vmatpush1.bf16.msra.mxu0 0
        %1658 = vmatprep.subr.bf16.mxu0 0
        %1659 = vmatpush1.bf16.msra.mxu0 0
        %1660 = vmatprep.subr.bf16.mxu0 0
        %1661 = vmatpush1.bf16.msra.mxu0 0
        %1662 = vmatprep.subr.bf16.mxu0 0
        %1663 = vmatpush1.bf16.msra.mxu0 0
        %1664 = vmatprep.subr.bf16.mxu0 0
        %1665 = vmatpush1.bf16.msra.mxu0 0
        %1666 = vmatprep.subr.bf16.mxu0 0
        %1667 = vmatpush1.bf16.msra.mxu0 0
        %1668 = vmatprep.subr.bf16.mxu0 0
        %1669 = vmatpush1.bf16.msra.mxu0 0
        %1670 = vmatprep.mubr.bf16.mxu0 0
        %1671 = vmatmul.mubr.bf16.gmra.mrb[0].mxu0 %v1602
        %v1672 = vpop.f32.mrb[0].mxu0
        %v1673 = vadd.f32 0.0, %v1672
        %v1674 = vpop.f32.mrb[0].mxu0
        %v1675 = vpop.f32.mrb[0].mxu0
        %v1676 = vadd.f32 0.0, %v1675
        %v1677 = vpop.f32.mrb[0].mxu0
        %1678 = vmatprep.mubr.bf16.mxu0 0
        %1679 = vmatmul.mubr.bf16.gmra.mrb[0].mxu0 %v1604
        %v1680 = vpop.f32.mrb[0].mxu0
        %v1681 = vadd.f32 0.0, %v1680
        %v1682 = vpop.f32.mrb[0].mxu0
        %v1683 = vpop.f32.mrb[0].mxu0
        %v1684 = vadd.f32 0.0, %v1683
        %v1685 = vpop.f32.mrb[0].mxu0
        %1686 = vmatprep.mubr.bf16.mxu0 0
        %1687 = vmatmul.mubr.bf16.gmra.mrb[0].mxu0 %v1606
        %v1688 = vpop.f32.mrb[0].mxu0
        %v1689 = vadd.f32 0.0, %v1688
        %v1690 = vpop.f32.mrb[0].mxu0
        %v1691 = vpop.f32.mrb[0].mxu0
        %v1692 = vadd.f32 0.0, %v1691
        %v1693 = vpop.f32.mrb[0].mxu0
        %1694 = vmatprep.mubr.bf16.mxu0 0
        %1695 = vmatmul.mubr.bf16.gmra.mrb[0].mxu0 %v1608
        %v1696 = vpop.f32.mrb[0].mxu0
        %v1697 = vadd.f32 0.0, %v1696
        %v1698 = vpop.f32.mrb[0].mxu0
        %v1699 = vpop.f32.mrb[0].mxu0
        %v1700 = vadd.f32 0.0, %v1699
        %v1701 = vpop.f32.mrb[0].mxu0
        %1702 = vmatprep.mubr.bf16.mxu0 0
        %1703 = vmatmul.mubr.bf16.gmra.mrb[0].mxu0 %v1610
        %v1704 = vpop.f32.mrb[0].mxu0
        %v1705 = vadd.f32 0.0, %v1704
        %v1706 = vpop.f32.mrb[0].mxu0
        %v1707 = vpop.f32.mrb[0].mxu0
        %v1708 = vadd.f32 0.0, %v1707
        %v1709 = vpop.f32.mrb[0].mxu0
        %1710 = vmatprep.mubr.bf16.mxu0 0
        %1711 = vmatmul.mubr.bf16.gmra.mrb[0].mxu0 %v1612
        %v1712 = vpop.f32.mrb[0].mxu0
        %v1713 = vadd.f32 0.0, %v1712
        %v1714 = vpop.f32.mrb[0].mxu0
        %v1715 = vpop.f32.mrb[0].mxu0
        %v1716 = vadd.f32 0.0, %v1715
        %v1717 = vpop.f32.mrb[0].mxu0
        %1718 = vmatprep.mubr.bf16.mxu0 0
        %1719 = vmatmul.mubr.bf16.gmra.mrb[0].mxu0 %v1614
        %v1720 = vpop.f32.mrb[0].mxu0
        %v1721 = vadd.f32 0.0, %v1720
        %v1722 = vpop.f32.mrb[0].mxu0
        %v1723 = vpop.f32.mrb[0].mxu0
        %v1724 = vadd.f32 0.0, %v1723
        %v1725 = vpop.f32.mrb[0].mxu0
        %1726 = vmatprep.mubr.bf16.mxu0 0
        %1727 = vmatmul.mubr.bf16.gmra.mrb[0].mxu0 %v1616
        %v1728 = vpop.f32.mrb[0].mxu0
        %v1729 = vadd.f32 0.0, %v1728
        %v1730 = vpop.f32.mrb[0].mxu0
        %v1731 = vpop.f32.mrb[0].mxu0
        %v1732 = vadd.f32 0.0, %v1731
        %v1733 = vpop.f32.mrb[0].mxu0
        %1734 = vmatprep.mubr.bf16.mxu0 0
        %1735 = vmatmul.mubr.bf16.gmra.mrb[0].mxu0 %v1618
        %v1736 = vpop.f32.mrb[0].mxu0
        %v1737 = vadd.f32 0.0, %v1736
        %v1738 = vpop.f32.mrb[0].mxu0
        %v1739 = vpop.f32.mrb[0].mxu0
        %v1740 = vadd.f32 0.0, %v1739
        %v1741 = vpop.f32.mrb[0].mxu0
        %1742 = vmatprep.mubr.bf16.mxu0 0
        %1743 = vmatmul.mubr.bf16.gmra.mrb[0].mxu0 %v1620
        %v1744 = vpop.f32.mrb[0].mxu0
        %v1745 = vadd.f32 0.0, %v1744
        %v1746 = vpop.f32.mrb[0].mxu0
        %v1747 = vpop.f32.mrb[0].mxu0
        %v1748 = vadd.f32 0.0, %v1747
        %v1749 = vpop.f32.mrb[0].mxu0
        %1750 = vmatprep.mubr.bf16.mxu0 0
        %1751 = vmatmul.mubr.bf16.gmra.mrb[0].mxu0 %v1622
        %v1752 = vpop.f32.mrb[0].mxu0
        %v1753 = vadd.f32 0.0, %v1752
        %v1754 = vpop.f32.mrb[0].mxu0
        %v1755 = vpop.f32.mrb[0].mxu0
        %v1756 = vadd.f32 0.0, %v1755
        %v1757 = vpop.f32.mrb[0].mxu0
        %1758 = vmatprep.mubr.bf16.mxu0 0
        %1759 = vmatmul.mubr.bf16.gmra.mrb[0].mxu0 %v1624
        %v1760 = vpop.f32.mrb[0].mxu0
        %v1761 = vadd.f32 0.0, %v1760
        %v1762 = vpop.f32.mrb[0].mxu0
        %v1763 = vpop.f32.mrb[0].mxu0
        %v1764 = vadd.f32 0.0, %v1763
        %v1765 = vpop.f32.mrb[0].mxu0
        %1766 = vmatprep.mubr.bf16.mxu0 0
        %1767 = vmatmul.mubr.bf16.gmra.mrb[0].mxu0 %v1626
        %v1768 = vpop.f32.mrb[0].mxu0
        %v1769 = vadd.f32 0.0, %v1768
        %v1770 = vpop.f32.mrb[0].mxu0
        %v1771 = vpop.f32.mrb[0].mxu0
        %v1772 = vadd.f32 0.0, %v1771
        %v1773 = vpop.f32.mrb[0].mxu0
        %1774 = vmatprep.mubr.bf16.mxu0 0
        %1775 = vmatmul.mubr.bf16.gmra.mrb[0].mxu0 %v1628
        %v1776 = vpop.f32.mrb[0].mxu0
        %v1777 = vadd.f32 0.0, %v1776
        %v1778 = vpop.f32.mrb[0].mxu0
        %v1779 = vpop.f32.mrb[0].mxu0
        %v1780 = vadd.f32 0.0, %v1779
        %v1781 = vpop.f32.mrb[0].mxu0
        %1782 = vmatprep.mubr.bf16.mxu0 0
        %1783 = vmatmul.mubr.bf16.gmra.mrb[0].mxu0 %v1630
        %v1784 = vpop.f32.mrb[0].mxu0
        %v1785 = vadd.f32 0.0, %v1784
        %v1786 = vpop.f32.mrb[0].mxu0
        %v1787 = vpop.f32.mrb[0].mxu0
        %v1788 = vadd.f32 0.0, %v1787
        %v1789 = vpop.f32.mrb[0].mxu0
        %1790 = vmatprep.mubr.bf16.mxu0 0
        %1791 = vmatmul.mubr.bf16.gmra.mrb[0].mxu0 %v1632
        %v1792 = vpop.f32.mrb[0].mxu0
        %v1793 = vadd.f32 0.0, %v1792
        %v1794 = vpop.f32.mrb[0].mxu0
        %v1795 = vpop.f32.mrb[0].mxu0
        %v1796 = vadd.f32 0.0, %v1795
        %v1797 = vpop.f32.mrb[0].mxu0
        %1798 = vdwg.mxu0
        %v1799 = vld [vmem:[%s188] sm:$0x1]
        %v1800 = vadd.f32 %v1673, %v1676
        %v1801 = vadd.f32 %v1800, %v1681
        %v1802 = vadd.f32 %v1801, %v1684
        %v1803 = vadd.f32 %v1802, %v1689
        %v1804 = vadd.f32 %v1803, %v1692
        %v1805 = vadd.f32 %v1804, %v1697
        %v1806 = vadd.f32 %v1805, %v1700
        %v1807 = vadd.f32 %v1806, %v1705
        %v1808 = vadd.f32 %v1807, %v1708
        %v1809 = vadd.f32 %v1808, %v1713
        %v1810 = vadd.f32 %v1809, %v1716
        %v1811 = vadd.f32 %v1810, %v1721
        %v1812 = vadd.f32 %v1811, %v1724
        %v1813 = vadd.f32 %v1812, %v1729
        %v1814 = vadd.f32 %v1813, %v1732
        %v1815 = vadd.f32 %v1814, %v1737
        %v1816 = vadd.f32 %v1815, %v1740
        %v1817 = vadd.f32 %v1816, %v1745
        %v1818 = vadd.f32 %v1817, %v1748
        %v1819 = vadd.f32 %v1818, %v1753
        %v1820 = vadd.f32 %v1819, %v1756
        %v1821 = vadd.f32 %v1820, %v1761
        %v1822 = vadd.f32 %v1821, %v1764
        %v1823 = vadd.f32 %v1822, %v1769
        %v1824 = vadd.f32 %v1823, %v1772
        %v1825 = vadd.f32 %v1824, %v1777
        %v1826 = vadd.f32 %v1825, %v1780
        %v1827 = vadd.f32 %v1826, %v1785
        %v1828 = vadd.f32 %v1827, %v1788
        %v1829 = vadd.f32 %v1828, %v1793
        %v1830 = vadd.f32 %v1829, %v1796
        %v1831 = vrot.slane %v1830, 4
        %v1832 = vadd.f32 %v1830, %v1831
        %v1833 = vrot.slane %v1832, 2
        %v1834 = vadd.f32 %v1832, %v1833
        %v1835 = vrot.slane %v1834, 1
        %v1836 = vadd.f32 %v1834, %v1835
        %v1837 = vadd.f32 %v1799, %v1836
        %1838 = vst [vmem:[%s188] sm:$0x1] %v1837
        %v1839 = vld [vmem:[%s194] sm:$0x1]
        %v1840 = vmul.f32 %v1673, %v1673
        %v1841 = vmul.f32 %v1676, %v1676
        %v1842 = vmul.f32 %v1681, %v1681
        %v1843 = vmul.f32 %v1684, %v1684
        %v1844 = vmul.f32 %v1689, %v1689
        %v1845 = vmul.f32 %v1692, %v1692
        %v1846 = vmul.f32 %v1697, %v1697
        %v1847 = vmul.f32 %v1700, %v1700
        %v1848 = vmul.f32 %v1705, %v1705
        %v1849 = vmul.f32 %v1708, %v1708
        %v1850 = vmul.f32 %v1713, %v1713
        %v1851 = vmul.f32 %v1716, %v1716
        %v1852 = vmul.f32 %v1721, %v1721
        %v1853 = vmul.f32 %v1724, %v1724
        %v1854 = vmul.f32 %v1729, %v1729
        %v1855 = vmul.f32 %v1732, %v1732
        %v1856 = vmul.f32 %v1737, %v1737
        %v1857 = vmul.f32 %v1740, %v1740
        %v1858 = vmul.f32 %v1745, %v1745
        %v1859 = vmul.f32 %v1748, %v1748
        %v1860 = vmul.f32 %v1753, %v1753
        %v1861 = vmul.f32 %v1756, %v1756
        %v1862 = vmul.f32 %v1761, %v1761
        %v1863 = vmul.f32 %v1764, %v1764
        %v1864 = vmul.f32 %v1769, %v1769
        %v1865 = vmul.f32 %v1772, %v1772
        %v1866 = vmul.f32 %v1777, %v1777
        %v1867 = vmul.f32 %v1780, %v1780
        %v1868 = vmul.f32 %v1785, %v1785
        %v1869 = vmul.f32 %v1788, %v1788
        %v1870 = vmul.f32 %v1793, %v1793
        %v1871 = vmul.f32 %v1796, %v1796
        %v1872 = vadd.f32 %v1840, %v1841
        %v1873 = vadd.f32 %v1872, %v1842
        %v1874 = vadd.f32 %v1873, %v1843
        %v1875 = vadd.f32 %v1874, %v1844
        %v1876 = vadd.f32 %v1875, %v1845
        %v1877 = vadd.f32 %v1876, %v1846
        %v1878 = vadd.f32 %v1877, %v1847
        %v1879 = vadd.f32 %v1878, %v1848
        %v1880 = vadd.f32 %v1879, %v1849
        %v1881 = vadd.f32 %v1880, %v1850
        %v1882 = vadd.f32 %v1881, %v1851
        %v1883 = vadd.f32 %v1882, %v1852
        %v1884 = vadd.f32 %v1883, %v1853
        %v1885 = vadd.f32 %v1884, %v1854
        %v1886 = vadd.f32 %v1885, %v1855
        %v1887 = vadd.f32 %v1886, %v1856
        %v1888 = vadd.f32 %v1887, %v1857
        %v1889 = vadd.f32 %v1888, %v1858
        %v1890 = vadd.f32 %v1889, %v1859
        %v1891 = vadd.f32 %v1890, %v1860
        %v1892 = vadd.f32 %v1891, %v1861
        %v1893 = vadd.f32 %v1892, %v1862
        %v1894 = vadd.f32 %v1893, %v1863
        %v1895 = vadd.f32 %v1894, %v1864
        %v1896 = vadd.f32 %v1895, %v1865
        %v1897 = vadd.f32 %v1896, %v1866
        %v1898 = vadd.f32 %v1897, %v1867
        %v1899 = vadd.f32 %v1898, %v1868
        %v1900 = vadd.f32 %v1899, %v1869
        %v1901 = vadd.f32 %v1900, %v1870
        %v1902 = vadd.f32 %v1901, %v1871
        %v1903 = vrot.slane %v1902, 4
        %v1904 = vadd.f32 %v1902, %v1903
        %v1905 = vrot.slane %v1904, 2
        %v1906 = vadd.f32 %v1904, %v1905
        %v1907 = vrot.slane %v1906, 1
        %v1908 = vadd.f32 %v1906, %v1907
        %v1909 = vadd.f32 %v1839, %v1908
        %1910 = vst [vmem:[%s194] sm:$0x1] %v1909
        %s1911 = sand.u32 %s90, 1
        %s1912 = scalar_lea.sflag [#allocation3], %s1911
        %s1913 = sand.u32 %s90, 1
        %s1914 = scalar_lea.vmem [#allocation2], %s1913
        %s1915 = sand.u32 %s116, 1
        %s1916 = scalar_lea.sflag [#allocation5], %s1915
        %s1917 = sand.u32 %s116, 1
        %s1918 = scalar_lea.vmem [#allocation4], %s1917
        // Predicated region
        $region33: #{tpu_custom_call.1} parent=27 // pred_check
          %p1919 = pneg %p100
        $region34: #{tpu_custom_call.1} parent=27 // pred_check_branch
          %1921 = sbr.rel (%p1919) target = $region36
        $region35: #{tpu_custom_call.1} parent=27 // pred_region
          %s1923 = ssub.s32 16, 16
          %1924 = vsyncadd %s1912, %s1923
          %s1925 = smul.addr %s25, 16
          %s1926 = scalar_lea.hbm %s2, %s1925
          %s1928 = sshll.u32 %s1914, 4
          %s1929 = int_to_ptr.vmem [resolvable:$true] %s1928
          %1931 = dma.vmem_to_hbm [thread:$0]  %s1929, 16, %s1926, %s1912
        $region36: #{tpu_custom_call.1} parent=27 // pred_fallthru
          _
        // Predicated region
        $region37: #{tpu_custom_call.1} parent=27 // pred_check
          %p1932 = pneg %p126
        $region38: #{tpu_custom_call.1} parent=27 // pred_check_branch
          %1934 = sbr.rel (%p1932) target = $region40
        $region39: #{tpu_custom_call.1} parent=27 // pred_region
          %s1936 = ssub.s32 16, 16
          %1937 = vsyncadd %s1916, %s1936
          %s1938 = smul.addr %s25, 16
          %s1939 = scalar_lea.hbm %s3, %s1938
          %s1941 = sshll.u32 %s1918, 4
          %s1942 = int_to_ptr.vmem [resolvable:$true] %s1941
          %1944 = dma.vmem_to_hbm [thread:$0]  %s1942, 16, %s1939, %s1916
        $region40: #{tpu_custom_call.1} parent=27 // pred_fallthru
          _
      $region28: #{tpu_custom_call.1} parent=5 // pred_fallthru
        _
      %p1945 = scmp.le.s32.totalorder 2, %s16
      // Predicated region
      $region41: #{tpu_custom_call.1} parent=5 // pred_check
        %p1946 = pneg %p1945
      $region42: #{tpu_custom_call.1} parent=5 // pred_check_branch
        %1948 = sbr.rel (%p1946) target = $region44
      $region43: #{tpu_custom_call.1} parent=5 // pred_region
        %s1949 = ssub.s32 %s16, 2
        // Predicated region
        $region45: #{tpu_custom_call.1} parent=43 // pred_check
          %p1950 = pneg %p106
        $region46: #{tpu_custom_call.1} parent=43 // pred_check_branch
          %1952 = sbr.rel (%p1950) target = $region48
        $region47: #{tpu_custom_call.1} parent=43 // pred_region
          %s1953 = sand.u32 %s91, 1
          %s1954 = scalar_lea.sflag [#allocation3], %s1953
          %s1955 = sand.u32 %s91, 1
          %s1956 = scalar_lea.vmem [#allocation2], %s1955
          %1957 = dma.done %s1954, 16
        $region48: #{tpu_custom_call.1} parent=43 // pred_fallthru
          _
        // Predicated region
        $region49: #{tpu_custom_call.1} parent=43 // pred_check
          %p1958 = pneg %p132
        $region50: #{tpu_custom_call.1} parent=43 // pred_check_branch
          %1960 = sbr.rel (%p1958) target = $region52
        $region51: #{tpu_custom_call.1} parent=43 // pred_region
          %s1961 = sand.u32 %s117, 1
          %s1962 = scalar_lea.sflag [#allocation5], %s1961
          %s1963 = sand.u32 %s117, 1
          %s1964 = scalar_lea.vmem [#allocation4], %s1963
          %1965 = dma.done %s1962, 16
        $region52: #{tpu_custom_call.1} parent=43 // pred_fallthru
          _
      $region44: #{tpu_custom_call.1} parent=5 // pred_fallthru
        _
    $region6: #{tpu_custom_call.1} parent=1 // loop_footer
      %s20 = sadd.s32 1, %s16
    $region7: #{tpu_custom_call.1} parent=1 // loop_footer_branch
      %15 = sbr.rel target = $region3
    $region8: #{tpu_custom_call.1} parent=1 // loop_exit
      _
    %1966 = vsyncpa [#allocation3], 1
    %s1967 = scalar_lea.sflag [#allocation3], 1
    %1968 = vsyncpa %s1967, 1
    %1969 = vsyncpa [#allocation5], 1
    %s1970 = scalar_lea.sflag [#allocation5], 1
    %1971 = vsyncpa %s1970, 1

</llo_original>
